<compile_context>
chip_gen: v7x
topology: tpu7x:2x2x1
jax: 0.10.0
libtpu: 0.0.40
codegen_flags: <defaults>
</compile_context>

<pallas_src>
import functools
import math

import jax
import jax.numpy as jnp
from jax.experimental import pallas as pl
from jax.experimental.pallas import tpu as pltpu


def _pair(v):
    return tuple(v) if isinstance(v, (tuple, list)) else (v, v)


def _subpixel_taps(k, s, p, d):
    """Per output phase: list of (kernel index, input offset) so that
    input row (hb + offset) feeds phase-output row hb through that tap."""
    per_phase = []
    for phase in range(s):
        taps = []
        for kk in range(k):
            num = phase + p - kk * d
            if num % s == 0:
                taps.append((kk, num // s))
        per_phase.append(taps)
    return per_phase


def _conv_transpose_kernel(x_ref, w_ref, b_ref, o_ref, *, th, wp, n_tw,
                           s_h, s_w, taps_h, taps_w):
    # x_ref: (1, H_xp, W_xp, C_in)   edge-padded original-resolution image,
    #                                resident in VMEM across all row tiles of
    #                                the same batch element (index map ~ batch).
    # w_ref: (s_h*s_w, nTH*nTW, C_in, C_out)  per-phase sub-kernels.
    # b_ref: (1, C_out)
    # o_ref: (s_h*s_w, 1, 1, th*wp, C_out)    one row tile, all phases.
    t = pl.program_id(1)
    hb0 = pl.multiple_of(t * th, th)        # first phase-output row of the tile
    c_in = x_ref.shape[-1]
    c_out = o_ref.shape[-1]
    m = th * wp
    bias = b_ref[...].astype(jnp.float32)   # (1, C_out) -- hoisted

    for iph in range(s_h):                  # static unroll over output phases
        for ipw in range(s_w):
            p = iph * s_w + ipw
            acc = jnp.zeros((m, c_out), jnp.float32)
            for ia, r_off in taps_h[iph]:   # only real taps (dummies skipped)
                r0 = hb0 + r_off
                for ib, c_off in taps_w[ipw]:
                    # (th, wp, C_in) slab; wp % 8 == 0 -> collapse is free.
                    xs = x_ref[0, pl.ds(r0, th), pl.ds(c_off, wp), :]
                    acc = acc + jnp.dot(xs.reshape(m, c_in),
                                        w_ref[p, ia * n_tw + ib],
                                        preferred_element_type=jnp.float32)
            o_ref[p, 0, 0, :, :] = (acc + bias).astype(o_ref.dtype)


def meta_conv_transpose2d(x, weight, bias=None, *, stride=1, padding=0,
                          output_padding=0, dilation=1, groups=1, row_tile=8):
    """Forward of MetaConvTranspose2d (== F.conv_transpose2d), groups=1 only."""
    if groups != 1:
        # TODO(synk): grouped transposed conv (block-diagonal weight) not implemented.
        raise NotImplementedError("groups != 1 is not supported")

    n, c_in, h, w = x.shape
    c_in_w, c_out, kh, kw = weight.shape
    assert c_in == c_in_w
    sh, sw = _pair(stride)
    p_h, p_w = _pair(padding)
    oph, opw = _pair(output_padding)
    dh, dw = _pair(dilation)

    h_out = (h - 1) * sh - 2 * p_h + dh * (kh - 1) + oph + 1
    w_out = (w - 1) * sw - 2 * p_w + dw * (kw - 1) + opw + 1

    # ---- static sub-pixel (phase) decomposition ----------------------------
    taps_h = _subpixel_taps(kh, sh, p_h, dh)
    taps_w = _subpixel_taps(kw, sw, p_w, dw)
    n_th = max(1, max(len(tl) for tl in taps_h))
    n_tw = max(1, max(len(tl) for tl in taps_w))
    roffs = [o for tl in taps_h for _, o in tl] or [0]
    coffs = [o for tl in taps_w for _, o in tl] or [0]

    hp = -(-h_out // sh)                     # output rows per phase
    wp = -(-w_out // sw)                     # output cols per phase
    wp_pad = -(-wp // 8) * 8                 # sublane-aligned (extra cols cropped)
    # Keep M = th*wp_pad from blowing past the vreg file.
    th = max(1, min(row_tile, hp, max(1, 2048 // wp_pad)))
    n_t = -(-hp // th)
    hp_pad = n_t * th

    pad_top = max(0, -min(roffs))
    pad_left = max(0, -min(coffs))
    pad_bot = max(0, hp_pad - 1 + max(max(roffs), 0) - (h - 1))
    pad_right = max(0, wp_pad - 1 + max(max(coffs), 0) - (w - 1))

    # ---- wrapper glue (caller's dtype preserved) ---------------------------
    compute_dtype = x.dtype
    x_nhwc = jnp.transpose(x, (0, 2, 3, 1))                      # channels on lanes
    x_pad = jnp.pad(x_nhwc, ((0, 0), (pad_top, pad_bot),
                             (pad_left, pad_right), (0, 0)))
    h_xp, w_xp = x_pad.shape[1], x_pad.shape[2]

    # Per-phase sub-kernels (s_h*s_w, nTH*nTW, C_in, C_out); dummy taps are zero
    # and are also skipped at trace time in the kernel.
    w_hwio = jnp.transpose(weight, (2, 3, 0, 1)).astype(compute_dtype)
    zero_tap = jnp.zeros((c_in, c_out), compute_dtype)
    blocks = []
    for iph in range(sh):
        for ipw in range(sw):
            taps = []
            for a in range(n_th):
                for b in range(n_tw):
                    if a < len(taps_h[iph]) and b < len(taps_w[ipw]):
                        taps.append(w_hwio[taps_h[iph][a][0], taps_w[ipw][b][0]])
                    else:
                        taps.append(zero_tap)
            blocks.append(jnp.stack(taps))
    w_sub = jnp.stack(blocks)
    p_tot = sh * sw

    if bias is None:
        bias = jnp.zeros((c_out,), jnp.float32)
    b2d = jnp.asarray(bias).reshape(1, c_out).astype(jnp.float32)

    # Static (tap index, padded offset) tables handed to the kernel via closure.
    k_taps_h = tuple(tuple((a, off + pad_top) for a, (_, off) in enumerate(tl))
                     for tl in taps_h)
    k_taps_w = tuple(tuple((b, off + pad_left) for b, (_, off) in enumerate(tl))
                     for tl in taps_w)

    # ---- VMEM budget (generation-aware) & cost hint ------------------------
    itemsize = jnp.dtype(compute_dtype).itemsize

    def _blk_bytes(shape, isz):
        lead = math.prod(shape[:-2]) if len(shape) > 2 else 1
        return lead * (-(-shape[-2] // 8) * 8) * (-(-shape[-1] // 128) * 128) * isz

    blk_bytes = (_blk_bytes((1, h_xp, w_xp, c_in), itemsize)
                 + _blk_bytes((p_tot, n_th * n_tw, c_in, c_out), itemsize)
                 + _blk_bytes((1, c_out), 4)
                 + _blk_bytes((p_tot, 1, 1, th * wp_pad, c_out), itemsize))
    try:   # v7x: 64 MiB/TC, v5e/v6e: 128 MiB -- cap below physical, floor above need
        vmem_cap = int(pltpu.get_tpu_info().vmem_capacity_bytes)
    except Exception:
        vmem_cap = 64 << 20
    vmem_limit = int(min(max(2 * blk_bytes + (8 << 20), 32 << 20),
                         max(int(0.85 * vmem_cap), 32 << 20)))

    cost = pl.CostEstimate(
        flops=int(2 * n * hp_pad * wp_pad * kh * kw * c_in * c_out),
        transcendentals=0,
        bytes_accessed=int(itemsize * (x_pad.size + w_sub.size
                                       + p_tot * n * hp_pad * wp_pad * c_out)
                           + 4 * c_out))

    grid = (n, n_t)
    y = pl.pallas_call(
        functools.partial(_conv_transpose_kernel, th=th, wp=wp_pad, n_tw=n_tw,
                          s_h=sh, s_w=sw, taps_h=k_taps_h, taps_w=k_taps_w),
        out_shape=jax.ShapeDtypeStruct((p_tot, n, n_t, th * wp_pad, c_out),
                                       compute_dtype),
        grid_spec=pltpu.PrefetchScalarGridSpec(
            num_scalar_prefetch=0,
            grid=grid,
            in_specs=[
                pl.BlockSpec((1, h_xp, w_xp, c_in), lambda i, j: (i, 0, 0, 0)),
                pl.BlockSpec((p_tot, n_th * n_tw, c_in, c_out),
                             lambda i, j: (0, 0, 0, 0)),
                pl.BlockSpec((1, c_out), lambda i, j: (0, 0)),
            ],
            out_specs=pl.BlockSpec((p_tot, 1, 1, th * wp_pad, c_out),
                                   lambda i, j: (0, i, j, 0, 0)),
        ),
        compiler_params=pltpu.CompilerParams(
            dimension_semantics=("parallel", "parallel"),
            vmem_limit_bytes=vmem_limit),
        cost_estimate=cost,
    )(x_pad, w_sub, b2d)

    # Phase interleave fused into the single NCHW-restoring copy:
    # (P, N, T, th*Wp, C) -> (s_h, s_w, N, Hp, Wp, C) -> (N, C, Hp, s_h, Wp, s_w)
    y = y.reshape(sh, sw, n, n_t, th, wp_pad, c_out)
    y = y.reshape(sh, sw, n, hp_pad, wp_pad, c_out)
    y = jnp.transpose(y, (2, 5, 3, 0, 4, 1))
    y = y.reshape(n, c_out, hp_pad * sh, wp_pad * sw)
    return y[:, :, :h_out, :w_out]


def _reference_conv_transpose2d(x, weight, bias, stride, padding,
                                output_padding, dilation):
    """Direct scatter-based reference (independent of the kernel's derivation)."""
    n, c_in, h, w = x.shape
    _, c_out, kh, kw = weight.shape
    sh, sw = _pair(stride)
    ph, pw = _pair(padding)
    oph, opw = _pair(output_padding)
    dh, dw = _pair(dilation)
    hf = (h - 1) * sh + dh * (kh - 1) + 1 + oph
    wf = (w - 1) * sw + dw * (kw - 1) + 1 + opw
    y = jnp.zeros((n, c_out, hf, wf), jnp.float32)
    for ikh in range(kh):
        for ikw in range(kw):
            contrib = jnp.einsum('nchw,cd->ndhw', x, weight[:, :, ikh, ikw])
            y = y.at[:, :,
                     ikh * dh: ikh * dh + (h - 1) * sh + 1: sh,
                     ikw * dw: ikw * dw + (w - 1) * sw + 1: sw].add(contrib)
    h_out = (h - 1) * sh - 2 * ph + dh * (kh - 1) + oph + 1
    w_out = (w - 1) * sw - 2 * pw + dw * (kw - 1) + opw + 1
    y = y[:, :, ph: ph + h_out, pw: pw + w_out]
    return y + bias.reshape(1, c_out, 1, 1)


if __name__ == "__main__":
    key = jax.random.PRNGKey(0)
    N = 2
    # (c_in, c_out, H, W, kh, kw, stride, padding, output_padding, dilation)
    configs = [
        (4, 8, 16, 16, 3, 3, 2, 1, 1, 1),   # the module's typical upsample case
        (4, 8, 16, 16, 3, 3, 3, 4, 0, 2),   # large padding + dilation, ragged Hp
        (4, 8, 16, 16, 3, 3, 1, 1, 0, 1),   # stride-1 path (single phase)
        (4, 8, 16, 16, 1, 1, 2, 0, 1, 1),   # phases with zero taps (bias only)
    ]
    for idx, (ci, co, hh, ww, kh_, kw_, s, p, op, d) in enumerate(configs):
        key, kx, kwt, kb = jax.random.split(key, 4)
        x = jax.random.normal(kx, (N, ci, hh, ww), dtype=jnp.float32)
        bound = 1.0 / math.sqrt(ci * kh_ * kw_)
        weight = jax.random.uniform(kwt, (ci, co, kh_, kw_), jnp.float32,
                                    -bound, bound)
        bias = jax.random.uniform(kb, (co,), jnp.float32, -bound, bound)

        out = meta_conv_transpose2d(x, weight, bias, stride=s, padding=p,
                                    output_padding=op, dilation=d, groups=1)
        out = jax.block_until_ready(out)

        ref = _reference_conv_transpose2d(x, weight, bias, s, p, op, d)
        h_out = (hh - 1) * s - 2 * p + d * (kh_ - 1) + op + 1
        w_out = (ww - 1) * s - 2 * p + d * (kw_ - 1) + op + 1
        assert out.shape == (N, co, h_out, w_out), (idx, out.shape)
        assert out.dtype == x.dtype, (idx, out.dtype)
        err = float(jnp.max(jnp.abs(out - ref)))
        assert err < 1e-4, (idx, err)

    print("KERNEL_OK")
</pallas_src>

<mosaic_0001>
module attributes {stable_mosaic.version = 11 : i64} {
  func.func @_conv_transpose_kernel(%arg0: i32, %arg1: i32, %arg2: memref<1x17x17x4xf32, #tpu.memory_space<vmem>>, %arg3: memref<4x4x4x8xf32, #tpu.memory_space<vmem>>, %arg4: memref<1x8xf32, #tpu.memory_space<vmem>>, %arg5: memref<4x1x1x128x8xf32, #tpu.memory_space<vmem>>) attributes {dimension_semantics = [#tpu.dimension_semantics<parallel>, #tpu.dimension_semantics<parallel>], iteration_bounds = array<i64: 2, 2>, scalar_prefetch = 0 : i64, scratch_operands = 0 : i64, tpu.core_type = #tpu.core_type<tc>, window_params = [{transform_indices = @transform_0, window_bounds = array<i64: 1, 17, 17, 4>}, {pipeline_mode = #tpu.pipeline_mode<synchronous>, transform_indices = @transform_1, window_bounds = array<i64: 4, 4, 4, 8>}, {pipeline_mode = #tpu.pipeline_mode<synchronous>, transform_indices = @transform_2, window_bounds = array<i64: 1, 8>}, {transform_indices = @transform_3, window_bounds = array<i64: 4, 1, 1, 128, 8>}]} {
    %c8_i32 = arith.constant 8 : i32
    %0 = arith.muli %arg1, %c8_i32 : i32
    %1 = tpu.assume_multiple %0, 8 : i32
    %c0 = arith.constant 0 : index
    %c0_0 = arith.constant 0 : index
    %2 = vector.load %arg4[%c0, %c0_0] : memref<1x8xf32, #tpu.memory_space<vmem>>, vector<1x8xf32>
    %cst = arith.constant 0.000000e+00 : f32
    %3 = vector.broadcast %cst : f32 to vector<128x8xf32>
    %c0_i32 = arith.constant 0 : i32
    %4 = arith.addi %1, %c0_i32 : i32
    %c0_1 = arith.constant 0 : index
    %5 = arith.index_cast %4 : i32 to index
    %c0_2 = arith.constant 0 : index
    %c0_3 = arith.constant 0 : index
    %6 = vector.load %arg2[%c0_1, %5, %c0_2, %c0_3] : memref<1x17x17x4xf32, #tpu.memory_space<vmem>>, vector<1x8x16x4xf32>
    %7 = vector.shape_cast %6 : vector<1x8x16x4xf32> to vector<8x16x4xf32>
    %8 = vector.shape_cast %7 : vector<8x16x4xf32> to vector<128x4xf32>
    %c0_4 = arith.constant 0 : index
    %c0_5 = arith.constant 0 : index
    %c0_6 = arith.constant 0 : index
    %c0_7 = arith.constant 0 : index
    %9 = vector.load %arg3[%c0_4, %c0_5, %c0_6, %c0_7] : memref<4x4x4x8xf32, #tpu.memory_space<vmem>>, vector<1x1x4x8xf32>
    %10 = vector.shape_cast %9 : vector<1x1x4x8xf32> to vector<4x8xf32>
    %cst_8 = arith.constant dense<0.000000e+00> : vector<128x8xf32>
    %11 = tpu.matmul %8, %10, %cst_8 {dimension_numbers = #tpu.dot_dimension_numbers<[1], [0], [0], [1], [0, 0, 1, 1], [], []>} : vector<128x4xf32>, vector<4x8xf32>, vector<128x8xf32> -> vector<128x8xf32>
    %12 = arith.addf %3, %11 : vector<128x8xf32>
    %13 = vector.broadcast %2 : vector<1x8xf32> to vector<128x8xf32>
    %14 = arith.addf %12, %13 : vector<128x8xf32>
    %c0_9 = arith.constant 0 : index
    %c0_10 = arith.constant 0 : index
    %c0_11 = arith.constant 0 : index
    %c0_12 = arith.constant 0 : index
    %c0_13 = arith.constant 0 : index
    %15 = vector.load %arg5[%c0_9, %c0_10, %c0_11, %c0_12, %c0_13] : memref<4x1x1x128x8xf32, #tpu.memory_space<vmem>>, vector<1x1x1x128x8xf32>
    %16 = vector.shape_cast %15 : vector<1x1x1x128x8xf32> to vector<128x8xf32>
    %17 = vector.shape_cast %14 : vector<128x8xf32> to vector<1x1x1x128x8xf32>
    tpu.vector_store %arg5[%c0_9, %c0_10, %c0_11, %c0_12, %c0_13], %17 {strides = array<i32>} : memref<4x1x1x128x8xf32, #tpu.memory_space<vmem>>, vector<1x1x1x128x8xf32>,
    %cst_14 = arith.constant 0.000000e+00 : f32
    %18 = vector.broadcast %cst_14 : f32 to vector<128x8xf32>
    %c0_i32_15 = arith.constant 0 : i32
    %19 = arith.addi %1, %c0_i32_15 : i32
    %c0_16 = arith.constant 0 : index
    %20 = arith.index_cast %19 : i32 to index
    %c1 = arith.constant 1 : index
    %c0_17 = arith.constant 0 : index
    %21 = vector.load %arg2[%c0_16, %20, %c1, %c0_17] : memref<1x17x17x4xf32, #tpu.memory_space<vmem>>, vector<1x8x16x4xf32>
    %22 = vector.shape_cast %21 : vector<1x8x16x4xf32> to vector<8x16x4xf32>
    %23 = vector.shape_cast %22 : vector<8x16x4xf32> to vector<128x4xf32>
    %c1_18 = arith.constant 1 : index
    %c0_19 = arith.constant 0 : index
    %c0_20 = arith.constant 0 : index
    %c0_21 = arith.constant 0 : index
    %24 = vector.load %arg3[%c1_18, %c0_19, %c0_20, %c0_21] : memref<4x4x4x8xf32, #tpu.memory_space<vmem>>, vector<1x1x4x8xf32>
    %25 = vector.shape_cast %24 : vector<1x1x4x8xf32> to vector<4x8xf32>
    %cst_22 = arith.constant dense<0.000000e+00> : vector<128x8xf32>
    %26 = tpu.matmul %23, %25, %cst_22 {dimension_numbers = #tpu.dot_dimension_numbers<[1], [0], [0], [1], [0, 0, 1, 1], [], []>} : vector<128x4xf32>, vector<4x8xf32>, vector<128x8xf32> -> vector<128x8xf32>
    %27 = arith.addf %18, %26 : vector<128x8xf32>
    %c0_23 = arith.constant 0 : index
    %28 = arith.index_cast %19 : i32 to index
    %c0_24 = arith.constant 0 : index
    %c0_25 = arith.constant 0 : index
    %29 = vector.load %arg2[%c0_23, %28, %c0_24, %c0_25] : memref<1x17x17x4xf32, #tpu.memory_space<vmem>>, vector<1x8x16x4xf32>
    %30 = vector.shape_cast %29 : vector<1x8x16x4xf32> to vector<8x16x4xf32>
    %31 = vector.shape_cast %30 : vector<8x16x4xf32> to vector<128x4xf32>
    %c1_26 = arith.constant 1 : index
    %c1_27 = arith.constant 1 : index
    %c0_28 = arith.constant 0 : index
    %c0_29 = arith.constant 0 : index
    %32 = vector.load %arg3[%c1_26, %c1_27, %c0_28, %c0_29] : memref<4x4x4x8xf32, #tpu.memory_space<vmem>>, vector<1x1x4x8xf32>
    %33 = vector.shape_cast %32 : vector<1x1x4x8xf32> to vector<4x8xf32>
    %cst_30 = arith.constant dense<0.000000e+00> : vector<128x8xf32>
    %34 = tpu.matmul %31, %33, %cst_30 {dimension_numbers = #tpu.dot_dimension_numbers<[1], [0], [0], [1], [0, 0, 1, 1], [], []>} : vector<128x4xf32>, vector<4x8xf32>, vector<128x8xf32> -> vector<128x8xf32>
    %35 = arith.addf %27, %34 : vector<128x8xf32>
    %36 = vector.broadcast %2 : vector<1x8xf32> to vector<128x8xf32>
    %37 = arith.addf %35, %36 : vector<128x8xf32>
    %c1_31 = arith.constant 1 : index
    %c0_32 = arith.constant 0 : index
    %c0_33 = arith.constant 0 : index
    %c0_34 = arith.constant 0 : index
    %c0_35 = arith.constant 0 : index
    %38 = vector.load %arg5[%c1_31, %c0_32, %c0_33, %c0_34, %c0_35] : memref<4x1x1x128x8xf32, #tpu.memory_space<vmem>>, vector<1x1x1x128x8xf32>
    %39 = vector.shape_cast %38 : vector<1x1x1x128x8xf32> to vector<128x8xf32>
    %40 = vector.shape_cast %37 : vector<128x8xf32> to vector<1x1x1x128x8xf32>
    tpu.vector_store %arg5[%c1_31, %c0_32, %c0_33, %c0_34, %c0_35], %40 {strides = array<i32>} : memref<4x1x1x128x8xf32, #tpu.memory_space<vmem>>, vector<1x1x1x128x8xf32>,
    %cst_36 = arith.constant 0.000000e+00 : f32
    %41 = vector.broadcast %cst_36 : f32 to vector<128x8xf32>
    %c1_i32 = arith.constant 1 : i32
    %42 = arith.addi %1, %c1_i32 : i32
    %c0_37 = arith.constant 0 : index
    %43 = arith.index_cast %42 : i32 to index
    %c0_38 = arith.constant 0 : index
    %c0_39 = arith.constant 0 : index
    %44 = vector.load %arg2[%c0_37, %43, %c0_38, %c0_39] : memref<1x17x17x4xf32, #tpu.memory_space<vmem>>, vector<1x8x16x4xf32>
    %45 = vector.shape_cast %44 : vector<1x8x16x4xf32> to vector<8x16x4xf32>
    %46 = vector.shape_cast %45 : vector<8x16x4xf32> to vector<128x4xf32>
    %c2 = arith.constant 2 : index
    %c0_40 = arith.constant 0 : index
    %c0_41 = arith.constant 0 : index
    %c0_42 = arith.constant 0 : index
    %47 = vector.load %arg3[%c2, %c0_40, %c0_41, %c0_42] : memref<4x4x4x8xf32, #tpu.memory_space<vmem>>, vector<1x1x4x8xf32>
    %48 = vector.shape_cast %47 : vector<1x1x4x8xf32> to vector<4x8xf32>
    %cst_43 = arith.constant dense<0.000000e+00> : vector<128x8xf32>
    %49 = tpu.matmul %46, %48, %cst_43 {dimension_numbers = #tpu.dot_dimension_numbers<[1], [0], [0], [1], [0, 0, 1, 1], [], []>} : vector<128x4xf32>, vector<4x8xf32>, vector<128x8xf32> -> vector<128x8xf32>
    %50 = arith.addf %41, %49 : vector<128x8xf32>
    %c0_i32_44 = arith.constant 0 : i32
    %51 = arith.addi %1, %c0_i32_44 : i32
    %c0_45 = arith.constant 0 : index
    %52 = arith.index_cast %51 : i32 to index
    %c0_46 = arith.constant 0 : index
    %c0_47 = arith.constant 0 : index
    %53 = vector.load %arg2[%c0_45, %52, %c0_46, %c0_47] : memref<1x17x17x4xf32, #tpu.memory_space<vmem>>, vector<1x8x16x4xf32>
    %54 = vector.shape_cast %53 : vector<1x8x16x4xf32> to vector<8x16x4xf32>
    %55 = vector.shape_cast %54 : vector<8x16x4xf32> to vector<128x4xf32>
    %c2_48 = arith.constant 2 : index
    %c2_49 = arith.constant 2 : index
    %c0_50 = arith.constant 0 : index
    %c0_51 = arith.constant 0 : index
    %56 = vector.load %arg3[%c2_48, %c2_49, %c0_50, %c0_51] : memref<4x4x4x8xf32, #tpu.memory_space<vmem>>, vector<1x1x4x8xf32>
    %57 = vector.shape_cast %56 : vector<1x1x4x8xf32> to vector<4x8xf32>
    %cst_52 = arith.constant dense<0.000000e+00> : vector<128x8xf32>
    %58 = tpu.matmul %55, %57, %cst_52 {dimension_numbers = #tpu.dot_dimension_numbers<[1], [0], [0], [1], [0, 0, 1, 1], [], []>} : vector<128x4xf32>, vector<4x8xf32>, vector<128x8xf32> -> vector<128x8xf32>
    %59 = arith.addf %50, %58 : vector<128x8xf32>
    %60 = vector.broadcast %2 : vector<1x8xf32> to vector<128x8xf32>
    %61 = arith.addf %59, %60 : vector<128x8xf32>
    %c2_53 = arith.constant 2 : index
    %c0_54 = arith.constant 0 : index
    %c0_55 = arith.constant 0 : index
    %c0_56 = arith.constant 0 : index
    %c0_57 = arith.constant 0 : index
    %62 = vector.load %arg5[%c2_53, %c0_54, %c0_55, %c0_56, %c0_57] : memref<4x1x1x128x8xf32, #tpu.memory_space<vmem>>, vector<1x1x1x128x8xf32>
    %63 = vector.shape_cast %62 : vector<1x1x1x128x8xf32> to vector<128x8xf32>
    %64 = vector.shape_cast %61 : vector<128x8xf32> to vector<1x1x1x128x8xf32>
    tpu.vector_store %arg5[%c2_53, %c0_54, %c0_55, %c0_56, %c0_57], %64 {strides = array<i32>} : memref<4x1x1x128x8xf32, #tpu.memory_space<vmem>>, vector<1x1x1x128x8xf32>,
    %cst_58 = arith.constant 0.000000e+00 : f32
    %65 = vector.broadcast %cst_58 : f32 to vector<128x8xf32>
    %c1_i32_59 = arith.constant 1 : i32
    %66 = arith.addi %1, %c1_i32_59 : i32
    %c0_60 = arith.constant 0 : index
    %67 = arith.index_cast %66 : i32 to index
    %c1_61 = arith.constant 1 : index
    %c0_62 = arith.constant 0 : index
    %68 = vector.load %arg2[%c0_60, %67, %c1_61, %c0_62] : memref<1x17x17x4xf32, #tpu.memory_space<vmem>>, vector<1x8x16x4xf32>
    %69 = vector.shape_cast %68 : vector<1x8x16x4xf32> to vector<8x16x4xf32>
    %70 = vector.shape_cast %69 : vector<8x16x4xf32> to vector<128x4xf32>
    %c3 = arith.constant 3 : index
    %c0_63 = arith.constant 0 : index
    %c0_64 = arith.constant 0 : index
    %c0_65 = arith.constant 0 : index
    %71 = vector.load %arg3[%c3, %c0_63, %c0_64, %c0_65] : memref<4x4x4x8xf32, #tpu.memory_space<vmem>>, vector<1x1x4x8xf32>
    %72 = vector.shape_cast %71 : vector<1x1x4x8xf32> to vector<4x8xf32>
    %cst_66 = arith.constant dense<0.000000e+00> : vector<128x8xf32>
    %73 = tpu.matmul %70, %72, %cst_66 {dimension_numbers = #tpu.dot_dimension_numbers<[1], [0], [0], [1], [0, 0, 1, 1], [], []>} : vector<128x4xf32>, vector<4x8xf32>, vector<128x8xf32> -> vector<128x8xf32>
    %74 = arith.addf %65, %73 : vector<128x8xf32>
    %c0_67 = arith.constant 0 : index
    %75 = arith.index_cast %66 : i32 to index
    %c0_68 = arith.constant 0 : index
    %c0_69 = arith.constant 0 : index
    %76 = vector.load %arg2[%c0_67, %75, %c0_68, %c0_69] : memref<1x17x17x4xf32, #tpu.memory_space<vmem>>, vector<1x8x16x4xf32>
    %77 = vector.shape_cast %76 : vector<1x8x16x4xf32> to vector<8x16x4xf32>
    %78 = vector.shape_cast %77 : vector<8x16x4xf32> to vector<128x4xf32>
    %c3_70 = arith.constant 3 : index
    %c1_71 = arith.constant 1 : index
    %c0_72 = arith.constant 0 : index
    %c0_73 = arith.constant 0 : index
    %79 = vector.load %arg3[%c3_70, %c1_71, %c0_72, %c0_73] : memref<4x4x4x8xf32, #tpu.memory_space<vmem>>, vector<1x1x4x8xf32>
    %80 = vector.shape_cast %79 : vector<1x1x4x8xf32> to vector<4x8xf32>
    %cst_74 = arith.constant dense<0.000000e+00> : vector<128x8xf32>
    %81 = tpu.matmul %78, %80, %cst_74 {dimension_numbers = #tpu.dot_dimension_numbers<[1], [0], [0], [1], [0, 0, 1, 1], [], []>} : vector<128x4xf32>, vector<4x8xf32>, vector<128x8xf32> -> vector<128x8xf32>
    %82 = arith.addf %74, %81 : vector<128x8xf32>
    %c0_i32_75 = arith.constant 0 : i32
    %83 = arith.addi %1, %c0_i32_75 : i32
    %c0_76 = arith.constant 0 : index
    %84 = arith.index_cast %83 : i32 to index
    %c1_77 = arith.constant 1 : index
    %c0_78 = arith.constant 0 : index
    %85 = vector.load %arg2[%c0_76, %84, %c1_77, %c0_78] : memref<1x17x17x4xf32, #tpu.memory_space<vmem>>, vector<1x8x16x4xf32>
    %86 = vector.shape_cast %85 : vector<1x8x16x4xf32> to vector<8x16x4xf32>
    %87 = vector.shape_cast %86 : vector<8x16x4xf32> to vector<128x4xf32>
    %c3_79 = arith.constant 3 : index
    %c2_80 = arith.constant 2 : index
    %c0_81 = arith.constant 0 : index
    %c0_82 = arith.constant 0 : index
    %88 = vector.load %arg3[%c3_79, %c2_80, %c0_81, %c0_82] : memref<4x4x4x8xf32, #tpu.memory_space<vmem>>, vector<1x1x4x8xf32>
    %89 = vector.shape_cast %88 : vector<1x1x4x8xf32> to vector<4x8xf32>
    %cst_83 = arith.constant dense<0.000000e+00> : vector<128x8xf32>
    %90 = tpu.matmul %87, %89, %cst_83 {dimension_numbers = #tpu.dot_dimension_numbers<[1], [0], [0], [1], [0, 0, 1, 1], [], []>} : vector<128x4xf32>, vector<4x8xf32>, vector<128x8xf32> -> vector<128x8xf32>
    %91 = arith.addf %82, %90 : vector<128x8xf32>
    %c0_84 = arith.constant 0 : index
    %92 = arith.index_cast %83 : i32 to index
    %c0_85 = arith.constant 0 : index
    %c0_86 = arith.constant 0 : index
    %93 = vector.load %arg2[%c0_84, %92, %c0_85, %c0_86] : memref<1x17x17x4xf32, #tpu.memory_space<vmem>>, vector<1x8x16x4xf32>
    %94 = vector.shape_cast %93 : vector<1x8x16x4xf32> to vector<8x16x4xf32>
    %95 = vector.shape_cast %94 : vector<8x16x4xf32> to vector<128x4xf32>
    %c3_87 = arith.constant 3 : index
    %c3_88 = arith.constant 3 : index
    %c0_89 = arith.constant 0 : index
    %c0_90 = arith.constant 0 : index
    %96 = vector.load %arg3[%c3_87, %c3_88, %c0_89, %c0_90] : memref<4x4x4x8xf32, #tpu.memory_space<vmem>>, vector<1x1x4x8xf32>
    %97 = vector.shape_cast %96 : vector<1x1x4x8xf32> to vector<4x8xf32>
    %cst_91 = arith.constant dense<0.000000e+00> : vector<128x8xf32>
    %98 = tpu.matmul %95, %97, %cst_91 {dimension_numbers = #tpu.dot_dimension_numbers<[1], [0], [0], [1], [0, 0, 1, 1], [], []>} : vector<128x4xf32>, vector<4x8xf32>, vector<128x8xf32> -> vector<128x8xf32>
    %99 = arith.addf %91, %98 : vector<128x8xf32>
    %100 = vector.broadcast %2 : vector<1x8xf32> to vector<128x8xf32>
    %101 = arith.addf %99, %100 : vector<128x8xf32>
    %c3_92 = arith.constant 3 : index
    %c0_93 = arith.constant 0 : index
    %c0_94 = arith.constant 0 : index
    %c0_95 = arith.constant 0 : index
    %c0_96 = arith.constant 0 : index
    %102 = vector.load %arg5[%c3_92, %c0_93, %c0_94, %c0_95, %c0_96] : memref<4x1x1x128x8xf32, #tpu.memory_space<vmem>>, vector<1x1x1x128x8xf32>
    %103 = vector.shape_cast %102 : vector<1x1x1x128x8xf32> to vector<128x8xf32>
    %104 = vector.shape_cast %101 : vector<128x8xf32> to vector<1x1x1x128x8xf32>
    tpu.vector_store %arg5[%c3_92, %c0_93, %c0_94, %c0_95, %c0_96], %104 {strides = array<i32>} : memref<4x1x1x128x8xf32, #tpu.memory_space<vmem>>, vector<1x1x1x128x8xf32>,
    return
  }
  func.func @transform_0(%arg0: i32, %arg1: i32) -> (i32, i32, i32, i32) {
    %c0_i32 = arith.constant 0 : i32
    %c0_i32_0 = arith.constant 0 : i32
    %c0_i32_1 = arith.constant 0 : i32
    %c0_i32_2 = arith.constant 0 : i32
    return %arg0, %c0_i32, %c0_i32_0, %c0_i32_1 : i32, i32, i32, i32
  }
  func.func @transform_1(%arg0: i32, %arg1: i32) -> (i32, i32, i32, i32) {
    %c0_i32 = arith.constant 0 : i32
    %c0_i32_0 = arith.constant 0 : i32
    %c0_i32_1 = arith.constant 0 : i32
    %c0_i32_2 = arith.constant 0 : i32
    %c0_i32_3 = arith.constant 0 : i32
    return %c0_i32, %c0_i32_0, %c0_i32_1, %c0_i32_2 : i32, i32, i32, i32
  }
  func.func @transform_2(%arg0: i32, %arg1: i32) -> (i32, i32) {
    %c0_i32 = arith.constant 0 : i32
    %c0_i32_0 = arith.constant 0 : i32
    %c0_i32_1 = arith.constant 0 : i32
    return %c0_i32, %c0_i32_0 : i32, i32
  }
  func.func @transform_3(%arg0: i32, %arg1: i32) -> (i32, i32, i32, i32, i32) {
    %c0_i32 = arith.constant 0 : i32
    %c0_i32_0 = arith.constant 0 : i32
    %c0_i32_1 = arith.constant 0 : i32
    %c0_i32_2 = arith.constant 0 : i32
    return %c0_i32, %arg0, %arg1, %c0_i32_0, %c0_i32_1 : i32, i32, i32, i32, i32
  }
}

</mosaic_0001>

<llo_original>
// kernel: tpu_custom_call.1
$region0: #{tpu_custom_call.1}
  #allocation0 [shape = 'u32[]', space=smem, size = 0x4, offset = 0x4, fixed_abs, tag = 'smem constant byte address 0x4 - core index']
  #allocation1 [shape = 'u32[144,128]{1,0:T(1,128)}', space=vmem, size = 0x12000, scoped, tag = 'internal scratch']
  %s0 = inlined_call_operand.vmem [shape: f32[2,17,17,4], index: 0, kind: input, shape index: {}]
  %s1 = inlined_call_operand.vmem [shape: f32[4,4,4,8], index: 1, kind: input, shape index: {}]
  %s2 = inlined_call_operand.vmem [shape: f32[1,8], index: 2, kind: input, shape index: {}]
  %s3 = inlined_call_operand.vmem [shape: f32[4,2,2,128,8], index: 3, kind: output, shape index: {}]
  %s4 = sld [smem:[#allocation0]]
  $region79: #{tpu_custom_call.1} parent=0
    _
  %s6 = ssub.s32 1, %s4
  %s7 = scalar_select 0, %s6, %s4
  $region1: #{tpu_custom_call.1} parent=0
    #allocation2 [shape = 'u8[524288]{0}', space=vmem, size = 0x80000, scoped, tag = 'output window, operand 0']
    loop: start=0, step=1, limit=6
    $region2: #{tpu_custom_call.1} parent=1 // loop_pre_header
      _
    $region3: #{tpu_custom_call.1} parent=1 // loop_header
      %s9 = sphi 0, %s13
      %p10 = scmp.ge.s32.totalorder %s9, 6
      %s16 = sphi 0, %s28
      %s17 = sphi 0, %s24
      %s18 = sphi 0, %s16
      %s19 = sphi 0, %s17
      %s20 = sphi 0, %s18
      %s21 = sphi 0, %s19
      %s31 = sphi 0, %s33
      %s34 = sphi 0, %s31
      %s35 = sphi 0, %s34
      %s51 = sphi 0, %s35
      %s55 = sphi 0, %s55
      %s57 = sphi 0, %s55
      %s58 = sphi 0, %s57
      %s72 = sphi 0, %s58
      %s76 = sphi 0, %s76
      %s78 = sphi 0, %s76
      %s79 = sphi 0, %s78
      %s93 = sphi 0, %s79
      %s101 = sphi 0, %s103
      %s104 = sphi 0, %s101
      %s105 = sphi 0, %s104
      %s121 = sphi 0, %s105
    $region4: #{tpu_custom_call.1} parent=1 // loop_header_branch
      %12 = sbr.rel (%p10) target = $region8
    $region5: #{tpu_custom_call.1} parent=1 // loop_body
      %s14 = ssub.s32 %s9, 1
      %s15 = ssub.s32 %s9, 2
      %s22 = sadd.s32 1, %s17
      %p23 = scmp.ge.s32.totalorder %s22, 2
      %s24 = scalar_select %p23, 0, %s22
      %s25 = sadd.s32 1, %s16
      %s26 = scalar_select %p23, %s25, %s16
      %p27 = scmp.ge.s32.totalorder %s26, 2
      %s28 = scalar_select %p27, 0, %s26
      %s29 = ssub.s32 %s16, %s28
      %p30 = scmp.eq.s32.totalorder %s29, 0
      %s32 = sadd.s32 %s31, 1
      %s33 = scalar_select %p30, %s31, %s32
      %p36 = pneg %p30
      %p37 = scmp.eq.s32.totalorder %s9, 3
      %p38 = por %p36, %p37
      %p39 = scmp.ne.s32.totalorder %s31, %s34
      %p40 = scmp.eq.s32.totalorder %s9, 0
      %p41 = por %p39, %p40
      %p42 = scmp.ne.s32.totalorder %s31, %s34
      %p43 = scmp.eq.s32.totalorder %s14, 3
      %p44 = por %p42, %p43
      %p45 = scmp.ne.s32.totalorder %s34, %s35
      %p46 = scmp.eq.s32.totalorder %s14, 0
      %p47 = por %p45, %p46
      %p48 = scmp.ne.s32.totalorder %s34, %s35
      %p49 = scmp.eq.s32.totalorder %s15, 3
      %p50 = por %p48, %p49
      %p52 = scmp.ne.s32.totalorder %s35, %s51
      %p53 = scmp.eq.s32.totalorder %s15, 0
      %p54 = por %p52, %p53
      %s56 = sadd.s32 %s55, 1
      %p59 = scmp.eq.s32.totalorder %s9, 3
      %p60 = scmp.ne.s32.totalorder %s55, %s57
      %p61 = scmp.eq.s32.totalorder %s9, 0
      %p62 = por %p60, %p61
      %p63 = scmp.ne.s32.totalorder %s55, %s57
      %p64 = scmp.eq.s32.totalorder %s14, 3
      %p65 = por %p63, %p64
      %p66 = scmp.ne.s32.totalorder %s57, %s58
      %p67 = scmp.eq.s32.totalorder %s14, 0
      %p68 = por %p66, %p67
      %p69 = scmp.ne.s32.totalorder %s57, %s58
      %p70 = scmp.eq.s32.totalorder %s15, 3
      %p71 = por %p69, %p70
      %p73 = scmp.ne.s32.totalorder %s58, %s72
      %p74 = scmp.eq.s32.totalorder %s15, 0
      %p75 = por %p73, %p74
      %s77 = sadd.s32 %s76, 1
      %p80 = scmp.eq.s32.totalorder %s9, 3
      %p81 = scmp.ne.s32.totalorder %s76, %s78
      %p82 = scmp.eq.s32.totalorder %s9, 0
      %p83 = por %p81, %p82
      %p84 = scmp.ne.s32.totalorder %s76, %s78
      %p85 = scmp.eq.s32.totalorder %s14, 3
      %p86 = por %p84, %p85
      %p87 = scmp.ne.s32.totalorder %s78, %s79
      %p88 = scmp.eq.s32.totalorder %s14, 0
      %p89 = por %p87, %p88
      %p90 = scmp.ne.s32.totalorder %s78, %s79
      %p91 = scmp.eq.s32.totalorder %s15, 3
      %p92 = por %p90, %p91
      %p94 = scmp.ne.s32.totalorder %s79, %s93
      %p95 = scmp.eq.s32.totalorder %s15, 0
      %p96 = por %p94, %p95
      %s97 = ssub.s32 %s16, %s28
      %s98 = ssub.s32 %s17, %s24
      %s99 = sor.u32 %s97, %s98
      %p100 = scmp.eq.s32.totalorder %s99, 0
      %s102 = sadd.s32 %s101, 1
      %s103 = scalar_select %p100, %s101, %s102
      %p106 = pneg %p100
      %p107 = scmp.eq.s32.totalorder %s9, 3
      %p108 = por %p106, %p107
      %p109 = scmp.ne.s32.totalorder %s101, %s104
      %p110 = scmp.eq.s32.totalorder %s9, 0
      %p111 = por %p109, %p110
      %p112 = scmp.ne.s32.totalorder %s101, %s104
      %p113 = scmp.eq.s32.totalorder %s14, 3
      %p114 = por %p112, %p113
      %p115 = scmp.ne.s32.totalorder %s104, %s105
      %p116 = scmp.eq.s32.totalorder %s14, 0
      %p117 = por %p115, %p116
      %p118 = scmp.ne.s32.totalorder %s104, %s105
      %p119 = scmp.eq.s32.totalorder %s15, 3
      %p120 = por %p118, %p119
      %p122 = scmp.ne.s32.totalorder %s105, %s121
      %p123 = scmp.eq.s32.totalorder %s15, 0
      %p124 = por %p122, %p123
      %p125 = scmp.le.s32.totalorder 1, %s9
      %p126 = scmp.lt.s32.totalorder %s9, 5
      %p127 = pnand %p125, %p126
      %p128 = pneg %p127
      // Predicated region
      $region9: #{tpu_custom_call.1} parent=5 // pred_check
        _
      $region10: #{tpu_custom_call.1} parent=5 // pred_check_branch
        %130 = sbr.rel (%p127) target = $region12
      $region11: #{tpu_custom_call.1} parent=5 // pred_region
        %s131 = ssub.s32 %s9, 1
        // Predicated region
        $region13: #{tpu_custom_call.1} parent=11 // pred_check
          %p132 = pneg %p68
        $region14: #{tpu_custom_call.1} parent=11 // pred_check_branch
          %134 = sbr.rel (%p132) target = $region16
        $region15: #{tpu_custom_call.1} parent=11 // pred_region
          _
        $region16: #{tpu_custom_call.1} parent=11 // pred_fallthru
          _
        // Predicated region
        $region17: #{tpu_custom_call.1} parent=11 // pred_check
          %p135 = pneg %p89
        $region18: #{tpu_custom_call.1} parent=11 // pred_check_branch
          %137 = sbr.rel (%p135) target = $region20
        $region19: #{tpu_custom_call.1} parent=11 // pred_region
          _
        $region20: #{tpu_custom_call.1} parent=11 // pred_fallthru
          _
      $region12: #{tpu_custom_call.1} parent=5 // pred_fallthru
        _
      %p138 = scmp.lt.s32.totalorder %s9, 4
      // Predicated region
      $region21: #{tpu_custom_call.1} parent=5 // pred_check
        %p139 = pneg %p138
      $region22: #{tpu_custom_call.1} parent=5 // pred_check_branch
        %141 = sbr.rel (%p139) target = $region24
      $region23: #{tpu_custom_call.1} parent=5 // pred_region
        // Predicated region
        $region25: #{tpu_custom_call.1} parent=23 // pred_check
          %p142 = pneg %p41
        $region26: #{tpu_custom_call.1} parent=23 // pred_check_branch
          %144 = sbr.rel (%p142) target = $region28
        $region27: #{tpu_custom_call.1} parent=23 // pred_region
          %p145 = scmp.lt.s32.totalorder %s16, 1
          %s146 = scalar_select %p145, %s16, 1
          %s147 = smul.addr %s146, 51
          %s148 = smul.addr %s147, 8
          %s149 = scalar_lea.vmem %s0, %s148
        $region28: #{tpu_custom_call.1} parent=23 // pred_fallthru
          _
      $region24: #{tpu_custom_call.1} parent=5 // pred_fallthru
        _
      %p150 = scmp.le.s32.totalorder 1, %s9
      %p151 = scmp.lt.s32.totalorder %s9, 5
      %p152 = pnand %p150, %p151
      %p153 = pneg %p152
      // Predicated region
      $region29: #{tpu_custom_call.1} parent=5 // pred_check
        _
      $region30: #{tpu_custom_call.1} parent=5 // pred_check_branch
        %155 = sbr.rel (%p152) target = $region32
      $region31: #{tpu_custom_call.1} parent=5 // pred_region
        %s156 = ssub.s32 %s9, 1
        %p157 = scmp.lt.s32.totalorder %s18, 1
        %s158 = scalar_select %p157, %s18, 1
        %s159 = smul.addr %s158, 51
        %s160 = smul.addr %s159, 8
        %s161 = scalar_lea.vmem %s0, %s160
        %p162 = pneg %p47
        %p163 = pneg %p44
        %p164 = pneg %p68
        %p165 = pneg %p65
        %p166 = pneg %p89
        %p167 = pneg %p86
        %p168 = pneg %p117
        %p169 = pneg %p114
        %s170 = sand.u32 %s104, 1
        %s171 = sand.u32 %s104, 1
        %s172 = smul.addr %s171, 512
        %s173 = scalar_lea.vmem [#allocation2], %s172
        %p174 = scmp.lt.s32.totalorder %s18, 1
        %s175 = scalar_select %p174, %s18, 1
        %s176 = smul.addr %s175, 51
        %s177 = smul.addr %s176, 8
        %s178 = scalar_lea.vmem %s0, %s177
        %s179 = smul.u32 %s19, 8
        %v180 = vld [vmem:[%s2] sm:$0x1]
        %s181 = smul.u32 %s179, 24
        %s182 = scalar_lea.vmem %s178, %s181
        %v183 = vld [vmem:[%s182] sm:$0xff]
        %v184 = vld [vmem:[%s182 + $0x8] sm:$0xff]
        %v185 = vld [vmem:[%s182 + $0x18] sm:$0xff]
        %v186 = vld [vmem:[%s182 + $0x20] sm:$0xff]
        %v187 = vld [vmem:[%s182 + $0x30] sm:$0xff]
        %v188 = vld [vmem:[%s182 + $0x38] sm:$0xff]
        %v189 = vld [vmem:[%s182 + $0x48] sm:$0xff]
        %v190 = vld [vmem:[%s182 + $0x50] sm:$0xff]
        %v191 = vld [vmem:[%s182 + $0x60] sm:$0xff]
        %v192 = vld [vmem:[%s182 + $0x68] sm:$0xff]
        %v193 = vld [vmem:[%s182 + $0x78] sm:$0xff]
        %v194 = vld [vmem:[%s182 + $0x80] sm:$0xff]
        %v195 = vld [vmem:[%s182 + $0x90] sm:$0xff]
        %v196 = vld [vmem:[%s182 + $0x98] sm:$0xff]
        %v197 = vld [vmem:[%s182 + $0xa8] sm:$0xff]
        %v198 = vld [vmem:[%s182 + $0xb0] sm:$0xff]
        %v199 = vld [vmem:[%s1] sm:$0xf]
        %v201 = vlaneseq
        %v202 = vshrl.u32 %v201, 7
        %v203 = vsub.s32 0, %v202
        %v204 = vrot.slane %v180, %v203
        %vm206 = vcmask 31744
        %v208 = vsel %vm206, %v183, 0
        %v211 = vsel %vm206, %v184, 0
        %v214 = vsel %vm206, %v185, 0
        %v217 = vsel %vm206, %v186, 0
        %v220 = vsel %vm206, %v187, 0
        %v223 = vsel %vm206, %v188, 0
        %v226 = vsel %vm206, %v189, 0
        %v229 = vsel %vm206, %v190, 0
        %v232 = vsel %vm206, %v191, 0
        %v235 = vsel %vm206, %v192, 0
        %v238 = vsel %vm206, %v193, 0
        %v241 = vsel %vm206, %v194, 0
        %v244 = vsel %vm206, %v195, 0
        %v247 = vsel %vm206, %v196, 0
        %v250 = vsel %vm206, %v197, 0
        %v253 = vsel %vm206, %v198, 0
        %vm255 = vcmask 1043456
        %v257 = vsel %vm255, %v199, 0
        %259 = vmatprep.subr.mxu0 0.0
        %260 = vmatpush1.msra.mxu0 %v257
        %261 = vmatprep.subr.mxu0 0.0
        %262 = vmatpush1.msra.mxu0 0.0
        %263 = vmatprep.subr.mxu0 0.0
        %264 = vmatpush1.msra.mxu0 0.0
        %265 = vmatprep.subr.mxu0 0.0
        %266 = vmatpush1.msra.mxu0 0.0
        %267 = vmatprep.subr.mxu0 0.0
        %268 = vmatpush1.msra.mxu0 0.0
        %269 = vmatprep.subr.mxu0 0.0
        %270 = vmatpush1.msra.mxu0 0.0
        %271 = vmatprep.subr.mxu0 0.0
        %272 = vmatpush1.msra.mxu0 0.0
        %273 = vmatprep.subr.mxu0 0.0
        %274 = vmatpush1.msra.mxu0 0.0
        %275 = vmatprep.subr.mxu0 0.0
        %276 = vmatpush1.msra.mxu0 0.0
        %277 = vmatprep.subr.mxu0 0.0
        %278 = vmatpush1.msra.mxu0 0.0
        %279 = vmatprep.subr.mxu0 0.0
        %280 = vmatpush1.msra.mxu0 0.0
        %281 = vmatprep.subr.mxu0 0.0
        %282 = vmatpush1.msra.mxu0 0.0
        %283 = vmatprep.subr.mxu0 0.0
        %284 = vmatpush1.msra.mxu0 0.0
        %285 = vmatprep.subr.mxu0 0.0
        %286 = vmatpush1.msra.mxu0 0.0
        %287 = vmatprep.subr.mxu0 0.0
        %288 = vmatpush1.msra.mxu0 0.0
        %289 = vmatprep.subr.mxu0 0.0
        %290 = vmatpush1.msra.mxu0 0.0
        %291 = vmatprep.subr.mxu0 0.0
        %292 = vmatpush1.msra.mxu0 0.0
        %293 = vmatprep.subr.mxu0 0.0
        %294 = vmatpush1.msra.mxu0 0.0
        %295 = vmatprep.subr.mxu0 0.0
        %296 = vmatpush1.msra.mxu0 0.0
        %297 = vmatprep.subr.mxu0 0.0
        %298 = vmatpush1.msra.mxu0 0.0
        %299 = vmatprep.subr.mxu0 0.0
        %300 = vmatpush1.msra.mxu0 0.0
        %301 = vmatprep.subr.mxu0 0.0
        %302 = vmatpush1.msra.mxu0 0.0
        %303 = vmatprep.subr.mxu0 0.0
        %304 = vmatpush1.msra.mxu0 0.0
        %305 = vmatprep.subr.mxu0 0.0
        %306 = vmatpush1.msra.mxu0 0.0
        %307 = vmatprep.subr.mxu0 0.0
        %308 = vmatpush1.msra.mxu0 0.0
        %309 = vmatprep.subr.mxu0 0.0
        %310 = vmatpush1.msra.mxu0 0.0
        %311 = vmatprep.subr.mxu0 0.0
        %312 = vmatpush1.msra.mxu0 0.0
        %313 = vmatprep.subr.mxu0 0.0
        %314 = vmatpush1.msra.mxu0 0.0
        %315 = vmatprep.subr.mxu0 0.0
        %316 = vmatpush1.msra.mxu0 0.0
        %317 = vmatprep.subr.mxu0 0.0
        %318 = vmatpush1.msra.mxu0 0.0
        %319 = vmatprep.subr.mxu0 0.0
        %320 = vmatpush1.msra.mxu0 0.0
        %321 = vmatprep.subr.mxu0 0.0
        %322 = vmatpush1.msra.mxu0 0.0
        %323 = vmatprep.mubr.f32.mxu0 0.0
        %324 = vmatmul.mubr.f32.gmra.mrb[0].mxu0 %v208
        %v325 = vpop.f32.mrb[0].mxu0
        %v326 = vadd.f32 %v204, %v325
        %v327 = vpop.f32.mrb[0].mxu0
        %328 = vmatprep.mubr.f32.mxu0 0.0
        %329 = vmatmul.mubr.f32.gmra.mrb[0].mxu0 %v211
        %v330 = vpop.f32.mrb[0].mxu0
        %v331 = vadd.f32 %v204, %v330
        %v332 = vpop.f32.mrb[0].mxu0
        %333 = vmatprep.mubr.f32.mxu0 0.0
        %334 = vmatmul.mubr.f32.gmra.mrb[0].mxu0 %v214
        %v335 = vpop.f32.mrb[0].mxu0
        %v336 = vadd.f32 %v204, %v335
        %v337 = vpop.f32.mrb[0].mxu0
        %338 = vmatprep.mubr.f32.mxu0 0.0
        %339 = vmatmul.mubr.f32.gmra.mrb[0].mxu0 %v217
        %v340 = vpop.f32.mrb[0].mxu0
        %v341 = vadd.f32 %v204, %v340
        %v342 = vpop.f32.mrb[0].mxu0
        %343 = vmatprep.mubr.f32.mxu0 0.0
        %344 = vmatmul.mubr.f32.gmra.mrb[0].mxu0 %v220
        %v345 = vpop.f32.mrb[0].mxu0
        %v346 = vadd.f32 %v204, %v345
        %v347 = vpop.f32.mrb[0].mxu0
        %348 = vmatprep.mubr.f32.mxu0 0.0
        %349 = vmatmul.mubr.f32.gmra.mrb[0].mxu0 %v223
        %v350 = vpop.f32.mrb[0].mxu0
        %v351 = vadd.f32 %v204, %v350
        %v352 = vpop.f32.mrb[0].mxu0
        %353 = vmatprep.mubr.f32.mxu0 0.0
        %354 = vmatmul.mubr.f32.gmra.mrb[0].mxu0 %v226
        %v355 = vpop.f32.mrb[0].mxu0
        %v356 = vadd.f32 %v204, %v355
        %v357 = vpop.f32.mrb[0].mxu0
        %358 = vmatprep.mubr.f32.mxu0 0.0
        %359 = vmatmul.mubr.f32.gmra.mrb[0].mxu0 %v229
        %v360 = vpop.f32.mrb[0].mxu0
        %v361 = vadd.f32 %v204, %v360
        %v362 = vpop.f32.mrb[0].mxu0
        %363 = vmatprep.mubr.f32.mxu0 0.0
        %364 = vmatmul.mubr.f32.gmra.mrb[0].mxu0 %v232
        %v365 = vpop.f32.mrb[0].mxu0
        %v366 = vadd.f32 %v204, %v365
        %v367 = vpop.f32.mrb[0].mxu0
        %368 = vmatprep.mubr.f32.mxu0 0.0
        %369 = vmatmul.mubr.f32.gmra.mrb[0].mxu0 %v235
        %v370 = vpop.f32.mrb[0].mxu0
        %v371 = vadd.f32 %v204, %v370
        %v372 = vpop.f32.mrb[0].mxu0
        %373 = vmatprep.mubr.f32.mxu0 0.0
        %374 = vmatmul.mubr.f32.gmra.mrb[0].mxu0 %v238
        %v375 = vpop.f32.mrb[0].mxu0
        %v376 = vadd.f32 %v204, %v375
        %v377 = vpop.f32.mrb[0].mxu0
        %378 = vmatprep.mubr.f32.mxu0 0.0
        %379 = vmatmul.mubr.f32.gmra.mrb[0].mxu0 %v241
        %v380 = vpop.f32.mrb[0].mxu0
        %v381 = vadd.f32 %v204, %v380
        %v382 = vpop.f32.mrb[0].mxu0
        %383 = vmatprep.mubr.f32.mxu0 0.0
        %384 = vmatmul.mubr.f32.gmra.mrb[0].mxu0 %v244
        %v385 = vpop.f32.mrb[0].mxu0
        %v386 = vadd.f32 %v204, %v385
        %v387 = vpop.f32.mrb[0].mxu0
        %388 = vmatprep.mubr.f32.mxu0 0.0
        %389 = vmatmul.mubr.f32.gmra.mrb[0].mxu0 %v247
        %v390 = vpop.f32.mrb[0].mxu0
        %v391 = vadd.f32 %v204, %v390
        %v392 = vpop.f32.mrb[0].mxu0
        %393 = vmatprep.mubr.f32.mxu0 0.0
        %394 = vmatmul.mubr.f32.gmra.mrb[0].mxu0 %v250
        %v395 = vpop.f32.mrb[0].mxu0
        %v396 = vadd.f32 %v204, %v395
        %v397 = vpop.f32.mrb[0].mxu0
        %398 = vmatprep.mubr.f32.mxu0 0.0
        %399 = vmatmul.mubr.f32.gmra.mrb[0].mxu0 %v253
        %v400 = vpop.f32.mrb[0].mxu0
        %v401 = vadd.f32 %v204, %v400
        %v402 = vpop.f32.mrb[0].mxu0
        %403 = vdwg.mxu0
        %vm404 = vcmask 64512
        %405 = vst.msk [vmem:[%s173] sm:$0xff] %vm404, %v326
        %406 = vst.msk [vmem:[%s173 + $0x8] sm:$0xff] %vm404, %v331
        %407 = vst.msk [vmem:[%s173 + $0x10] sm:$0xff] %vm404, %v336
        %408 = vst.msk [vmem:[%s173 + $0x18] sm:$0xff] %vm404, %v341
        %409 = vst.msk [vmem:[%s173 + $0x20] sm:$0xff] %vm404, %v346
        %410 = vst.msk [vmem:[%s173 + $0x28] sm:$0xff] %vm404, %v351
        %411 = vst.msk [vmem:[%s173 + $0x30] sm:$0xff] %vm404, %v356
        %412 = vst.msk [vmem:[%s173 + $0x38] sm:$0xff] %vm404, %v361
        %413 = vst.msk [vmem:[%s173 + $0x40] sm:$0xff] %vm404, %v366
        %414 = vst.msk [vmem:[%s173 + $0x48] sm:$0xff] %vm404, %v371
        %415 = vst.msk [vmem:[%s173 + $0x50] sm:$0xff] %vm404, %v376
        %416 = vst.msk [vmem:[%s173 + $0x58] sm:$0xff] %vm404, %v381
        %417 = vst.msk [vmem:[%s173 + $0x60] sm:$0xff] %vm404, %v386
        %418 = vst.msk [vmem:[%s173 + $0x68] sm:$0xff] %vm404, %v391
        %419 = vst.msk [vmem:[%s173 + $0x70] sm:$0xff] %vm404, %v396
        %420 = vst.msk [vmem:[%s173 + $0x78] sm:$0xff] %vm404, %v401
        %v421 = vld [vmem:[%s182 + $0x1] sm:$0xff]
        %v422 = vld [vmem:[%s182 + $0x9] sm:$0xff]
        %v423 = vld [vmem:[%s182 + $0x19] sm:$0xff]
        %v424 = vld [vmem:[%s182 + $0x21] sm:$0xff]
        %v425 = vld [vmem:[%s182 + $0x31] sm:$0xff]
        %v426 = vld [vmem:[%s182 + $0x39] sm:$0xff]
        %v427 = vld [vmem:[%s182 + $0x49] sm:$0xff]
        %v428 = vld [vmem:[%s182 + $0x51] sm:$0xff]
        %v429 = vld [vmem:[%s182 + $0x61] sm:$0xff]
        %v430 = vld [vmem:[%s182 + $0x69] sm:$0xff]
        %v431 = vld [vmem:[%s182 + $0x79] sm:$0xff]
        %v432 = vld [vmem:[%s182 + $0x81] sm:$0xff]
        %v433 = vld [vmem:[%s182 + $0x91] sm:$0xff]
        %v434 = vld [vmem:[%s182 + $0x99] sm:$0xff]
        %v435 = vld [vmem:[%s182 + $0xa9] sm:$0xff]
        %v436 = vld [vmem:[%s182 + $0xb1] sm:$0xff]
        %s437 = scalar_lea.vmem %s1, 16
        %v438 = vld [vmem:[%s437] sm:$0xf]
        %v439 = vld [vmem:[%s182] sm:$0xff]
        %v440 = vld [vmem:[%s182 + $0x8] sm:$0xff]
        %v441 = vld [vmem:[%s182 + $0x18] sm:$0xff]
        %v442 = vld [vmem:[%s182 + $0x20] sm:$0xff]
        %v443 = vld [vmem:[%s182 + $0x30] sm:$0xff]
        %v444 = vld [vmem:[%s182 + $0x38] sm:$0xff]
        %v445 = vld [vmem:[%s182 + $0x48] sm:$0xff]
        %v446 = vld [vmem:[%s182 + $0x50] sm:$0xff]
        %v447 = vld [vmem:[%s182 + $0x60] sm:$0xff]
        %v448 = vld [vmem:[%s182 + $0x68] sm:$0xff]
        %v449 = vld [vmem:[%s182 + $0x78] sm:$0xff]
        %v450 = vld [vmem:[%s182 + $0x80] sm:$0xff]
        %v451 = vld [vmem:[%s182 + $0x90] sm:$0xff]
        %v452 = vld [vmem:[%s182 + $0x98] sm:$0xff]
        %v453 = vld [vmem:[%s182 + $0xa8] sm:$0xff]
        %v454 = vld [vmem:[%s182 + $0xb0] sm:$0xff]
        %s455 = scalar_lea.vmem %s1, 20
        %v456 = vld [vmem:[%s455] sm:$0xf]
        %v458 = vsel %vm206, %v439, 0
        %v461 = vsel %vm206, %v440, 0
        %v464 = vsel %vm206, %v441, 0
        %v467 = vsel %vm206, %v442, 0
        %v470 = vsel %vm206, %v443, 0
        %v473 = vsel %vm206, %v444, 0
        %v476 = vsel %vm206, %v445, 0
        %v479 = vsel %vm206, %v446, 0
        %v482 = vsel %vm206, %v447, 0
        %v485 = vsel %vm206, %v448, 0
        %v488 = vsel %vm206, %v449, 0
        %v491 = vsel %vm206, %v450, 0
        %v494 = vsel %vm206, %v451, 0
        %v497 = vsel %vm206, %v452, 0
        %v500 = vsel %vm206, %v453, 0
        %v503 = vsel %vm206, %v454, 0
        %v506 = vsel %vm255, %v456, 0
        %508 = vmatprep.subr.mxu0 0.0
        %509 = vmatpush1.msra.mxu0 %v506
        %510 = vmatprep.subr.mxu0 0.0
        %511 = vmatpush1.msra.mxu0 0.0
        %512 = vmatprep.subr.mxu0 0.0
        %513 = vmatpush1.msra.mxu0 0.0
        %514 = vmatprep.subr.mxu0 0.0
        %515 = vmatpush1.msra.mxu0 0.0
        %516 = vmatprep.subr.mxu0 0.0
        %517 = vmatpush1.msra.mxu0 0.0
        %518 = vmatprep.subr.mxu0 0.0
        %519 = vmatpush1.msra.mxu0 0.0
        %520 = vmatprep.subr.mxu0 0.0
        %521 = vmatpush1.msra.mxu0 0.0
        %522 = vmatprep.subr.mxu0 0.0
        %523 = vmatpush1.msra.mxu0 0.0
        %524 = vmatprep.subr.mxu0 0.0
        %525 = vmatpush1.msra.mxu0 0.0
        %526 = vmatprep.subr.mxu0 0.0
        %527 = vmatpush1.msra.mxu0 0.0
        %528 = vmatprep.subr.mxu0 0.0
        %529 = vmatpush1.msra.mxu0 0.0
        %530 = vmatprep.subr.mxu0 0.0
        %531 = vmatpush1.msra.mxu0 0.0
        %532 = vmatprep.subr.mxu0 0.0
        %533 = vmatpush1.msra.mxu0 0.0
        %534 = vmatprep.subr.mxu0 0.0
        %535 = vmatpush1.msra.mxu0 0.0
        %536 = vmatprep.subr.mxu0 0.0
        %537 = vmatpush1.msra.mxu0 0.0
        %538 = vmatprep.subr.mxu0 0.0
        %539 = vmatpush1.msra.mxu0 0.0
        %540 = vmatprep.subr.mxu0 0.0
        %541 = vmatpush1.msra.mxu0 0.0
        %542 = vmatprep.subr.mxu0 0.0
        %543 = vmatpush1.msra.mxu0 0.0
        %544 = vmatprep.subr.mxu0 0.0
        %545 = vmatpush1.msra.mxu0 0.0
        %546 = vmatprep.subr.mxu0 0.0
        %547 = vmatpush1.msra.mxu0 0.0
        %548 = vmatprep.subr.mxu0 0.0
        %549 = vmatpush1.msra.mxu0 0.0
        %550 = vmatprep.subr.mxu0 0.0
        %551 = vmatpush1.msra.mxu0 0.0
        %552 = vmatprep.subr.mxu0 0.0
        %553 = vmatpush1.msra.mxu0 0.0
        %554 = vmatprep.subr.mxu0 0.0
        %555 = vmatpush1.msra.mxu0 0.0
        %556 = vmatprep.subr.mxu0 0.0
        %557 = vmatpush1.msra.mxu0 0.0
        %558 = vmatprep.subr.mxu0 0.0
        %559 = vmatpush1.msra.mxu0 0.0
        %560 = vmatprep.subr.mxu0 0.0
        %561 = vmatpush1.msra.mxu0 0.0
        %562 = vmatprep.subr.mxu0 0.0
        %563 = vmatpush1.msra.mxu0 0.0
        %564 = vmatprep.subr.mxu0 0.0
        %565 = vmatpush1.msra.mxu0 0.0
        %566 = vmatprep.subr.mxu0 0.0
        %567 = vmatpush1.msra.mxu0 0.0
        %568 = vmatprep.subr.mxu0 0.0
        %569 = vmatpush1.msra.mxu0 0.0
        %570 = vmatprep.subr.mxu0 0.0
        %571 = vmatpush1.msra.mxu0 0.0
        %572 = vmatprep.mubr.f32.mxu0 0.0
        %573 = vmatmul.mubr.f32.gmra.mrb[0].mxu0 %v458
        %v574 = vpop.f32.mrb[0].mxu0
        %v575 = vadd.f32 0.0, %v574
        %v576 = vpop.f32.mrb[0].mxu0
        %577 = vmatprep.mubr.f32.mxu0 0.0
        %578 = vmatmul.mubr.f32.gmra.mrb[0].mxu0 %v461
        %v579 = vpop.f32.mrb[0].mxu0
        %v580 = vadd.f32 0.0, %v579
        %v581 = vpop.f32.mrb[0].mxu0
        %582 = vmatprep.mubr.f32.mxu0 0.0
        %583 = vmatmul.mubr.f32.gmra.mrb[0].mxu0 %v464
        %v584 = vpop.f32.mrb[0].mxu0
        %v585 = vadd.f32 0.0, %v584
        %v586 = vpop.f32.mrb[0].mxu0
        %587 = vmatprep.mubr.f32.mxu0 0.0
        %588 = vmatmul.mubr.f32.gmra.mrb[0].mxu0 %v467
        %v589 = vpop.f32.mrb[0].mxu0
        %v590 = vadd.f32 0.0, %v589
        %v591 = vpop.f32.mrb[0].mxu0
        %592 = vmatprep.mubr.f32.mxu0 0.0
        %593 = vmatmul.mubr.f32.gmra.mrb[0].mxu0 %v470
        %v594 = vpop.f32.mrb[0].mxu0
        %v595 = vadd.f32 0.0, %v594
        %v596 = vpop.f32.mrb[0].mxu0
        %597 = vmatprep.mubr.f32.mxu0 0.0
        %598 = vmatmul.mubr.f32.gmra.mrb[0].mxu0 %v473
        %v599 = vpop.f32.mrb[0].mxu0
        %v600 = vadd.f32 0.0, %v599
        %v601 = vpop.f32.mrb[0].mxu0
        %602 = vmatprep.mubr.f32.mxu0 0.0
        %603 = vmatmul.mubr.f32.gmra.mrb[0].mxu0 %v476
        %v604 = vpop.f32.mrb[0].mxu0
        %v605 = vadd.f32 0.0, %v604
        %v606 = vpop.f32.mrb[0].mxu0
        %607 = vmatprep.mubr.f32.mxu0 0.0
        %608 = vmatmul.mubr.f32.gmra.mrb[0].mxu0 %v479
        %v609 = vpop.f32.mrb[0].mxu0
        %v610 = vadd.f32 0.0, %v609
        %v611 = vpop.f32.mrb[0].mxu0
        %612 = vmatprep.mubr.f32.mxu0 0.0
        %613 = vmatmul.mubr.f32.gmra.mrb[0].mxu0 %v482
        %v614 = vpop.f32.mrb[0].mxu0
        %v615 = vadd.f32 0.0, %v614
        %v616 = vpop.f32.mrb[0].mxu0
        %617 = vmatprep.mubr.f32.mxu0 0.0
        %618 = vmatmul.mubr.f32.gmra.mrb[0].mxu0 %v485
        %v619 = vpop.f32.mrb[0].mxu0
        %v620 = vadd.f32 0.0, %v619
        %v621 = vpop.f32.mrb[0].mxu0
        %622 = vmatprep.mubr.f32.mxu0 0.0
        %623 = vmatmul.mubr.f32.gmra.mrb[0].mxu0 %v488
        %v624 = vpop.f32.mrb[0].mxu0
        %v625 = vadd.f32 0.0, %v624
        %v626 = vpop.f32.mrb[0].mxu0
        %627 = vmatprep.mubr.f32.mxu0 0.0
        %628 = vmatmul.mubr.f32.gmra.mrb[0].mxu0 %v491
        %v629 = vpop.f32.mrb[0].mxu0
        %v630 = vadd.f32 0.0, %v629
        %v631 = vpop.f32.mrb[0].mxu0
        %632 = vmatprep.mubr.f32.mxu0 0.0
        %633 = vmatmul.mubr.f32.gmra.mrb[0].mxu0 %v494
        %v634 = vpop.f32.mrb[0].mxu0
        %v635 = vadd.f32 0.0, %v634
        %v636 = vpop.f32.mrb[0].mxu0
        %637 = vmatprep.mubr.f32.mxu0 0.0
        %638 = vmatmul.mubr.f32.gmra.mrb[0].mxu0 %v497
        %v639 = vpop.f32.mrb[0].mxu0
        %v640 = vadd.f32 0.0, %v639
        %v641 = vpop.f32.mrb[0].mxu0
        %642 = vmatprep.mubr.f32.mxu0 0.0
        %643 = vmatmul.mubr.f32.gmra.mrb[0].mxu0 %v500
        %v644 = vpop.f32.mrb[0].mxu0
        %v645 = vadd.f32 0.0, %v644
        %v646 = vpop.f32.mrb[0].mxu0
        %647 = vmatprep.mubr.f32.mxu0 0.0
        %648 = vmatmul.mubr.f32.gmra.mrb[0].mxu0 %v503
        %v649 = vpop.f32.mrb[0].mxu0
        %v650 = vadd.f32 0.0, %v649
        %v651 = vpop.f32.mrb[0].mxu0
        %652 = vdwg.mxu0
        %v654 = vsel %vm206, %v421, 0
        %v657 = vsel %vm206, %v422, 0
        %v660 = vsel %vm206, %v423, 0
        %v663 = vsel %vm206, %v424, 0
        %v666 = vsel %vm206, %v425, 0
        %v669 = vsel %vm206, %v426, 0
        %v672 = vsel %vm206, %v427, 0
        %v675 = vsel %vm206, %v428, 0
        %v678 = vsel %vm206, %v429, 0
        %v681 = vsel %vm206, %v430, 0
        %v684 = vsel %vm206, %v431, 0
        %v687 = vsel %vm206, %v432, 0
        %v690 = vsel %vm206, %v433, 0
        %v693 = vsel %vm206, %v434, 0
        %v696 = vsel %vm206, %v435, 0
        %v699 = vsel %vm206, %v436, 0
        %v702 = vsel %vm255, %v438, 0
        %704 = vmatprep.subr.mxu0 0.0
        %705 = vmatpush1.msra.mxu0 %v702
        %706 = vmatprep.subr.mxu0 0.0
        %707 = vmatpush1.msra.mxu0 0.0
        %708 = vmatprep.subr.mxu0 0.0
        %709 = vmatpush1.msra.mxu0 0.0
        %710 = vmatprep.subr.mxu0 0.0
        %711 = vmatpush1.msra.mxu0 0.0
        %712 = vmatprep.subr.mxu0 0.0
        %713 = vmatpush1.msra.mxu0 0.0
        %714 = vmatprep.subr.mxu0 0.0
        %715 = vmatpush1.msra.mxu0 0.0
        %716 = vmatprep.subr.mxu0 0.0
        %717 = vmatpush1.msra.mxu0 0.0
        %718 = vmatprep.subr.mxu0 0.0
        %719 = vmatpush1.msra.mxu0 0.0
        %720 = vmatprep.subr.mxu0 0.0
        %721 = vmatpush1.msra.mxu0 0.0
        %722 = vmatprep.subr.mxu0 0.0
        %723 = vmatpush1.msra.mxu0 0.0
        %724 = vmatprep.subr.mxu0 0.0
        %725 = vmatpush1.msra.mxu0 0.0
        %726 = vmatprep.subr.mxu0 0.0
        %727 = vmatpush1.msra.mxu0 0.0
        %728 = vmatprep.subr.mxu0 0.0
        %729 = vmatpush1.msra.mxu0 0.0
        %730 = vmatprep.subr.mxu0 0.0
        %731 = vmatpush1.msra.mxu0 0.0
        %732 = vmatprep.subr.mxu0 0.0
        %733 = vmatpush1.msra.mxu0 0.0
        %734 = vmatprep.subr.mxu0 0.0
        %735 = vmatpush1.msra.mxu0 0.0
        %736 = vmatprep.subr.mxu0 0.0
        %737 = vmatpush1.msra.mxu0 0.0
        %738 = vmatprep.subr.mxu0 0.0
        %739 = vmatpush1.msra.mxu0 0.0
        %740 = vmatprep.subr.mxu0 0.0
        %741 = vmatpush1.msra.mxu0 0.0
        %742 = vmatprep.subr.mxu0 0.0
        %743 = vmatpush1.msra.mxu0 0.0
        %744 = vmatprep.subr.mxu0 0.0
        %745 = vmatpush1.msra.mxu0 0.0
        %746 = vmatprep.subr.mxu0 0.0
        %747 = vmatpush1.msra.mxu0 0.0
        %748 = vmatprep.subr.mxu0 0.0
        %749 = vmatpush1.msra.mxu0 0.0
        %750 = vmatprep.subr.mxu0 0.0
        %751 = vmatpush1.msra.mxu0 0.0
        %752 = vmatprep.subr.mxu0 0.0
        %753 = vmatpush1.msra.mxu0 0.0
        %754 = vmatprep.subr.mxu0 0.0
        %755 = vmatpush1.msra.mxu0 0.0
        %756 = vmatprep.subr.mxu0 0.0
        %757 = vmatpush1.msra.mxu0 0.0
        %758 = vmatprep.subr.mxu0 0.0
        %759 = vmatpush1.msra.mxu0 0.0
        %760 = vmatprep.subr.mxu0 0.0
        %761 = vmatpush1.msra.mxu0 0.0
        %762 = vmatprep.subr.mxu0 0.0
        %763 = vmatpush1.msra.mxu0 0.0
        %764 = vmatprep.subr.mxu0 0.0
        %765 = vmatpush1.msra.mxu0 0.0
        %766 = vmatprep.subr.mxu0 0.0
        %767 = vmatpush1.msra.mxu0 0.0
        %768 = vmatprep.mubr.f32.mxu0 0.0
        %769 = vmatmul.mubr.f32.gmra.mrb[0].mxu0 %v654
        %v770 = vpop.f32.mrb[0].mxu0
        %v771 = vadd.f32 %v575, %v770
        %v772 = vpop.f32.mrb[0].mxu0
        %773 = vmatprep.mubr.f32.mxu0 0.0
        %774 = vmatmul.mubr.f32.gmra.mrb[0].mxu0 %v657
        %v775 = vpop.f32.mrb[0].mxu0
        %v776 = vadd.f32 %v580, %v775
        %v777 = vpop.f32.mrb[0].mxu0
        %778 = vmatprep.mubr.f32.mxu0 0.0
        %779 = vmatmul.mubr.f32.gmra.mrb[0].mxu0 %v660
        %v780 = vpop.f32.mrb[0].mxu0
        %v781 = vadd.f32 %v585, %v780
        %v782 = vpop.f32.mrb[0].mxu0
        %783 = vmatprep.mubr.f32.mxu0 0.0
        %784 = vmatmul.mubr.f32.gmra.mrb[0].mxu0 %v663
        %v785 = vpop.f32.mrb[0].mxu0
        %v786 = vadd.f32 %v590, %v785
        %v787 = vpop.f32.mrb[0].mxu0
        %788 = vmatprep.mubr.f32.mxu0 0.0
        %789 = vmatmul.mubr.f32.gmra.mrb[0].mxu0 %v666
        %v790 = vpop.f32.mrb[0].mxu0
        %v791 = vadd.f32 %v595, %v790
        %v792 = vpop.f32.mrb[0].mxu0
        %793 = vmatprep.mubr.f32.mxu0 0.0
        %794 = vmatmul.mubr.f32.gmra.mrb[0].mxu0 %v669
        %v795 = vpop.f32.mrb[0].mxu0
        %v796 = vadd.f32 %v600, %v795
        %v797 = vpop.f32.mrb[0].mxu0
        %798 = vmatprep.mubr.f32.mxu0 0.0
        %799 = vmatmul.mubr.f32.gmra.mrb[0].mxu0 %v672
        %v800 = vpop.f32.mrb[0].mxu0
        %v801 = vadd.f32 %v605, %v800
        %v802 = vpop.f32.mrb[0].mxu0
        %803 = vmatprep.mubr.f32.mxu0 0.0
        %804 = vmatmul.mubr.f32.gmra.mrb[0].mxu0 %v675
        %v805 = vpop.f32.mrb[0].mxu0
        %v806 = vadd.f32 %v610, %v805
        %v807 = vpop.f32.mrb[0].mxu0
        %808 = vmatprep.mubr.f32.mxu0 0.0
        %809 = vmatmul.mubr.f32.gmra.mrb[0].mxu0 %v678
        %v810 = vpop.f32.mrb[0].mxu0
        %v811 = vadd.f32 %v615, %v810
        %v812 = vpop.f32.mrb[0].mxu0
        %813 = vmatprep.mubr.f32.mxu0 0.0
        %814 = vmatmul.mubr.f32.gmra.mrb[0].mxu0 %v681
        %v815 = vpop.f32.mrb[0].mxu0
        %v816 = vadd.f32 %v620, %v815
        %v817 = vpop.f32.mrb[0].mxu0
        %818 = vmatprep.mubr.f32.mxu0 0.0
        %819 = vmatmul.mubr.f32.gmra.mrb[0].mxu0 %v684
        %v820 = vpop.f32.mrb[0].mxu0
        %v821 = vadd.f32 %v625, %v820
        %v822 = vpop.f32.mrb[0].mxu0
        %823 = vmatprep.mubr.f32.mxu0 0.0
        %824 = vmatmul.mubr.f32.gmra.mrb[0].mxu0 %v687
        %v825 = vpop.f32.mrb[0].mxu0
        %v826 = vadd.f32 %v630, %v825
        %v827 = vpop.f32.mrb[0].mxu0
        %828 = vmatprep.mubr.f32.mxu0 0.0
        %829 = vmatmul.mubr.f32.gmra.mrb[0].mxu0 %v690
        %v830 = vpop.f32.mrb[0].mxu0
        %v831 = vadd.f32 %v635, %v830
        %v832 = vpop.f32.mrb[0].mxu0
        %833 = vmatprep.mubr.f32.mxu0 0.0
        %834 = vmatmul.mubr.f32.gmra.mrb[0].mxu0 %v693
        %v835 = vpop.f32.mrb[0].mxu0
        %v836 = vadd.f32 %v640, %v835
        %v837 = vpop.f32.mrb[0].mxu0
        %838 = vmatprep.mubr.f32.mxu0 0.0
        %839 = vmatmul.mubr.f32.gmra.mrb[0].mxu0 %v696
        %v840 = vpop.f32.mrb[0].mxu0
        %v841 = vadd.f32 %v645, %v840
        %v842 = vpop.f32.mrb[0].mxu0
        %843 = vmatprep.mubr.f32.mxu0 0.0
        %844 = vmatmul.mubr.f32.gmra.mrb[0].mxu0 %v699
        %v845 = vpop.f32.mrb[0].mxu0
        %v846 = vadd.f32 %v650, %v845
        %v847 = vpop.f32.mrb[0].mxu0
        %848 = vdwg.mxu0
        %v849 = vadd.f32 %v771, %v204
        %v850 = vadd.f32 %v776, %v204
        %v851 = vadd.f32 %v781, %v204
        %v852 = vadd.f32 %v786, %v204
        %v853 = vadd.f32 %v791, %v204
        %v854 = vadd.f32 %v796, %v204
        %v855 = vadd.f32 %v801, %v204
        %v856 = vadd.f32 %v806, %v204
        %v857 = vadd.f32 %v811, %v204
        %v858 = vadd.f32 %v816, %v204
        %v859 = vadd.f32 %v821, %v204
        %v860 = vadd.f32 %v826, %v204
        %v861 = vadd.f32 %v831, %v204
        %v862 = vadd.f32 %v836, %v204
        %v863 = vadd.f32 %v841, %v204
        %v864 = vadd.f32 %v846, %v204
        %s865 = scalar_lea.vmem %s173, 128 [#allocation2]
        %866 = vst.msk [vmem:[%s865] sm:$0xff] %vm404, %v849
        %867 = vst.msk [vmem:[%s865 + $0x8] sm:$0xff] %vm404, %v850
        %868 = vst.msk [vmem:[%s865 + $0x10] sm:$0xff] %vm404, %v851
        %869 = vst.msk [vmem:[%s865 + $0x18] sm:$0xff] %vm404, %v852
        %870 = vst.msk [vmem:[%s865 + $0x20] sm:$0xff] %vm404, %v853
        %871 = vst.msk [vmem:[%s865 + $0x28] sm:$0xff] %vm404, %v854
        %872 = vst.msk [vmem:[%s865 + $0x30] sm:$0xff] %vm404, %v855
        %873 = vst.msk [vmem:[%s865 + $0x38] sm:$0xff] %vm404, %v856
        %874 = vst.msk [vmem:[%s865 + $0x40] sm:$0xff] %vm404, %v857
        %875 = vst.msk [vmem:[%s865 + $0x48] sm:$0xff] %vm404, %v858
        %876 = vst.msk [vmem:[%s865 + $0x50] sm:$0xff] %vm404, %v859
        %877 = vst.msk [vmem:[%s865 + $0x58] sm:$0xff] %vm404, %v860
        %878 = vst.msk [vmem:[%s865 + $0x60] sm:$0xff] %vm404, %v861
        %879 = vst.msk [vmem:[%s865 + $0x68] sm:$0xff] %vm404, %v862
        %880 = vst.msk [vmem:[%s865 + $0x70] sm:$0xff] %vm404, %v863
        %881 = vst.msk [vmem:[%s865 + $0x78] sm:$0xff] %vm404, %v864
        %s882 = sadd.s32 %s179, 1
        %s883 = smul.u32 %s882, 24
        %s884 = scalar_lea.vmem %s178, %s883
        %v885 = vld [vmem:[%s884] sm:$0xff]
        %v886 = vld [vmem:[%s884 + $0x8] sm:$0xff]
        %v887 = vld [vmem:[%s884 + $0x18] sm:$0xff]
        %v888 = vld [vmem:[%s884 + $0x20] sm:$0xff]
        %v889 = vld [vmem:[%s884 + $0x30] sm:$0xff]
        %v890 = vld [vmem:[%s884 + $0x38] sm:$0xff]
        %v891 = vld [vmem:[%s884 + $0x48] sm:$0xff]
        %v892 = vld [vmem:[%s884 + $0x50] sm:$0xff]
        %v893 = vld [vmem:[%s884 + $0x60] sm:$0xff]
        %v894 = vld [vmem:[%s884 + $0x68] sm:$0xff]
        %v895 = vld [vmem:[%s884 + $0x78] sm:$0xff]
        %v896 = vld [vmem:[%s884 + $0x80] sm:$0xff]
        %v897 = vld [vmem:[%s884 + $0x90] sm:$0xff]
        %v898 = vld [vmem:[%s884 + $0x98] sm:$0xff]
        %v899 = vld [vmem:[%s884 + $0xa8] sm:$0xff]
        %v900 = vld [vmem:[%s884 + $0xb0] sm:$0xff]
        %s901 = scalar_lea.vmem %s1, 32
        %v902 = vld [vmem:[%s901] sm:$0xf]
        %v903 = vld [vmem:[%s182] sm:$0xff]
        %v904 = vld [vmem:[%s182 + $0x8] sm:$0xff]
        %v905 = vld [vmem:[%s182 + $0x18] sm:$0xff]
        %v906 = vld [vmem:[%s182 + $0x20] sm:$0xff]
        %v907 = vld [vmem:[%s182 + $0x30] sm:$0xff]
        %v908 = vld [vmem:[%s182 + $0x38] sm:$0xff]
        %v909 = vld [vmem:[%s182 + $0x48] sm:$0xff]
        %v910 = vld [vmem:[%s182 + $0x50] sm:$0xff]
        %v911 = vld [vmem:[%s182 + $0x60] sm:$0xff]
        %v912 = vld [vmem:[%s182 + $0x68] sm:$0xff]
        %v913 = vld [vmem:[%s182 + $0x78] sm:$0xff]
        %v914 = vld [vmem:[%s182 + $0x80] sm:$0xff]
        %v915 = vld [vmem:[%s182 + $0x90] sm:$0xff]
        %v916 = vld [vmem:[%s182 + $0x98] sm:$0xff]
        %v917 = vld [vmem:[%s182 + $0xa8] sm:$0xff]
        %v918 = vld [vmem:[%s182 + $0xb0] sm:$0xff]
        %s919 = scalar_lea.vmem %s1, 40
        %v920 = vld [vmem:[%s919] sm:$0xf]
        %v922 = vsel %vm206, %v903, 0
        %v925 = vsel %vm206, %v904, 0
        %v928 = vsel %vm206, %v905, 0
        %v931 = vsel %vm206, %v906, 0
        %v934 = vsel %vm206, %v907, 0
        %v937 = vsel %vm206, %v908, 0
        %v940 = vsel %vm206, %v909, 0
        %v943 = vsel %vm206, %v910, 0
        %v946 = vsel %vm206, %v911, 0
        %v949 = vsel %vm206, %v912, 0
        %v952 = vsel %vm206, %v913, 0
        %v955 = vsel %vm206, %v914, 0
        %v958 = vsel %vm206, %v915, 0
        %v961 = vsel %vm206, %v916, 0
        %v964 = vsel %vm206, %v917, 0
        %v967 = vsel %vm206, %v918, 0
        %v970 = vsel %vm255, %v920, 0
        %972 = vmatprep.subr.mxu0 0.0
        %973 = vmatpush1.msra.mxu0 %v970
        %974 = vmatprep.subr.mxu0 0.0
        %975 = vmatpush1.msra.mxu0 0.0
        %976 = vmatprep.subr.mxu0 0.0
        %977 = vmatpush1.msra.mxu0 0.0
        %978 = vmatprep.subr.mxu0 0.0
        %979 = vmatpush1.msra.mxu0 0.0
        %980 = vmatprep.subr.mxu0 0.0
        %981 = vmatpush1.msra.mxu0 0.0
        %982 = vmatprep.subr.mxu0 0.0
        %983 = vmatpush1.msra.mxu0 0.0
        %984 = vmatprep.subr.mxu0 0.0
        %985 = vmatpush1.msra.mxu0 0.0
        %986 = vmatprep.subr.mxu0 0.0
        %987 = vmatpush1.msra.mxu0 0.0
        %988 = vmatprep.subr.mxu0 0.0
        %989 = vmatpush1.msra.mxu0 0.0
        %990 = vmatprep.subr.mxu0 0.0
        %991 = vmatpush1.msra.mxu0 0.0
        %992 = vmatprep.subr.mxu0 0.0
        %993 = vmatpush1.msra.mxu0 0.0
        %994 = vmatprep.subr.mxu0 0.0
        %995 = vmatpush1.msra.mxu0 0.0
        %996 = vmatprep.subr.mxu0 0.0
        %997 = vmatpush1.msra.mxu0 0.0
        %998 = vmatprep.subr.mxu0 0.0
        %999 = vmatpush1.msra.mxu0 0.0
        %1000 = vmatprep.subr.mxu0 0.0
        %1001 = vmatpush1.msra.mxu0 0.0
        %1002 = vmatprep.subr.mxu0 0.0
        %1003 = vmatpush1.msra.mxu0 0.0
        %1004 = vmatprep.subr.mxu0 0.0
        %1005 = vmatpush1.msra.mxu0 0.0
        %1006 = vmatprep.subr.mxu0 0.0
        %1007 = vmatpush1.msra.mxu0 0.0
        %1008 = vmatprep.subr.mxu0 0.0
        %1009 = vmatpush1.msra.mxu0 0.0
        %1010 = vmatprep.subr.mxu0 0.0
        %1011 = vmatpush1.msra.mxu0 0.0
        %1012 = vmatprep.subr.mxu0 0.0
        %1013 = vmatpush1.msra.mxu0 0.0
        %1014 = vmatprep.subr.mxu0 0.0
        %1015 = vmatpush1.msra.mxu0 0.0
        %1016 = vmatprep.subr.mxu0 0.0
        %1017 = vmatpush1.msra.mxu0 0.0
        %1018 = vmatprep.subr.mxu0 0.0
        %1019 = vmatpush1.msra.mxu0 0.0
        %1020 = vmatprep.subr.mxu0 0.0
        %1021 = vmatpush1.msra.mxu0 0.0
        %1022 = vmatprep.subr.mxu0 0.0
        %1023 = vmatpush1.msra.mxu0 0.0
        %1024 = vmatprep.subr.mxu0 0.0
        %1025 = vmatpush1.msra.mxu0 0.0
        %1026 = vmatprep.subr.mxu0 0.0
        %1027 = vmatpush1.msra.mxu0 0.0
        %1028 = vmatprep.subr.mxu0 0.0
        %1029 = vmatpush1.msra.mxu0 0.0
        %1030 = vmatprep.subr.mxu0 0.0
        %1031 = vmatpush1.msra.mxu0 0.0
        %1032 = vmatprep.subr.mxu0 0.0
        %1033 = vmatpush1.msra.mxu0 0.0
        %1034 = vmatprep.subr.mxu0 0.0
        %1035 = vmatpush1.msra.mxu0 0.0
        %1036 = vmatprep.mubr.f32.mxu0 0.0
        %1037 = vmatmul.mubr.f32.gmra.mrb[0].mxu0 %v922
        %v1038 = vpop.f32.mrb[0].mxu0
        %v1039 = vadd.f32 0.0, %v1038
        %v1040 = vpop.f32.mrb[0].mxu0
        %1041 = vmatprep.mubr.f32.mxu0 0.0
        %1042 = vmatmul.mubr.f32.gmra.mrb[0].mxu0 %v925
        %v1043 = vpop.f32.mrb[0].mxu0
        %v1044 = vadd.f32 0.0, %v1043
        %v1045 = vpop.f32.mrb[0].mxu0
        %1046 = vmatprep.mubr.f32.mxu0 0.0
        %1047 = vmatmul.mubr.f32.gmra.mrb[0].mxu0 %v928
        %v1048 = vpop.f32.mrb[0].mxu0
        %v1049 = vadd.f32 0.0, %v1048
        %v1050 = vpop.f32.mrb[0].mxu0
        %1051 = vmatprep.mubr.f32.mxu0 0.0
        %1052 = vmatmul.mubr.f32.gmra.mrb[0].mxu0 %v931
        %v1053 = vpop.f32.mrb[0].mxu0
        %v1054 = vadd.f32 0.0, %v1053
        %v1055 = vpop.f32.mrb[0].mxu0
        %1056 = vmatprep.mubr.f32.mxu0 0.0
        %1057 = vmatmul.mubr.f32.gmra.mrb[0].mxu0 %v934
        %v1058 = vpop.f32.mrb[0].mxu0
        %v1059 = vadd.f32 0.0, %v1058
        %v1060 = vpop.f32.mrb[0].mxu0
        %1061 = vmatprep.mubr.f32.mxu0 0.0
        %1062 = vmatmul.mubr.f32.gmra.mrb[0].mxu0 %v937
        %v1063 = vpop.f32.mrb[0].mxu0
        %v1064 = vadd.f32 0.0, %v1063
        %v1065 = vpop.f32.mrb[0].mxu0
        %1066 = vmatprep.mubr.f32.mxu0 0.0
        %1067 = vmatmul.mubr.f32.gmra.mrb[0].mxu0 %v940
        %v1068 = vpop.f32.mrb[0].mxu0
        %v1069 = vadd.f32 0.0, %v1068
        %v1070 = vpop.f32.mrb[0].mxu0
        %1071 = vmatprep.mubr.f32.mxu0 0.0
        %1072 = vmatmul.mubr.f32.gmra.mrb[0].mxu0 %v943
        %v1073 = vpop.f32.mrb[0].mxu0
        %v1074 = vadd.f32 0.0, %v1073
        %v1075 = vpop.f32.mrb[0].mxu0
        %1076 = vmatprep.mubr.f32.mxu0 0.0
        %1077 = vmatmul.mubr.f32.gmra.mrb[0].mxu0 %v946
        %v1078 = vpop.f32.mrb[0].mxu0
        %v1079 = vadd.f32 0.0, %v1078
        %v1080 = vpop.f32.mrb[0].mxu0
        %1081 = vmatprep.mubr.f32.mxu0 0.0
        %1082 = vmatmul.mubr.f32.gmra.mrb[0].mxu0 %v949
        %v1083 = vpop.f32.mrb[0].mxu0
        %v1084 = vadd.f32 0.0, %v1083
        %v1085 = vpop.f32.mrb[0].mxu0
        %1086 = vmatprep.mubr.f32.mxu0 0.0
        %1087 = vmatmul.mubr.f32.gmra.mrb[0].mxu0 %v952
        %v1088 = vpop.f32.mrb[0].mxu0
        %v1089 = vadd.f32 0.0, %v1088
        %v1090 = vpop.f32.mrb[0].mxu0
        %1091 = vmatprep.mubr.f32.mxu0 0.0
        %1092 = vmatmul.mubr.f32.gmra.mrb[0].mxu0 %v955
        %v1093 = vpop.f32.mrb[0].mxu0
        %v1094 = vadd.f32 0.0, %v1093
        %v1095 = vpop.f32.mrb[0].mxu0
        %1096 = vmatprep.mubr.f32.mxu0 0.0
        %1097 = vmatmul.mubr.f32.gmra.mrb[0].mxu0 %v958
        %v1098 = vpop.f32.mrb[0].mxu0
        %v1099 = vadd.f32 0.0, %v1098
        %v1100 = vpop.f32.mrb[0].mxu0
        %1101 = vmatprep.mubr.f32.mxu0 0.0
        %1102 = vmatmul.mubr.f32.gmra.mrb[0].mxu0 %v961
        %v1103 = vpop.f32.mrb[0].mxu0
        %v1104 = vadd.f32 0.0, %v1103
        %v1105 = vpop.f32.mrb[0].mxu0
        %1106 = vmatprep.mubr.f32.mxu0 0.0
        %1107 = vmatmul.mubr.f32.gmra.mrb[0].mxu0 %v964
        %v1108 = vpop.f32.mrb[0].mxu0
        %v1109 = vadd.f32 0.0, %v1108
        %v1110 = vpop.f32.mrb[0].mxu0
        %1111 = vmatprep.mubr.f32.mxu0 0.0
        %1112 = vmatmul.mubr.f32.gmra.mrb[0].mxu0 %v967
        %v1113 = vpop.f32.mrb[0].mxu0
        %v1114 = vadd.f32 0.0, %v1113
        %v1115 = vpop.f32.mrb[0].mxu0
        %1116 = vdwg.mxu0
        %v1118 = vsel %vm206, %v885, 0
        %v1121 = vsel %vm206, %v886, 0
        %v1124 = vsel %vm206, %v887, 0
        %v1127 = vsel %vm206, %v888, 0
        %v1130 = vsel %vm206, %v889, 0
        %v1133 = vsel %vm206, %v890, 0
        %v1136 = vsel %vm206, %v891, 0
        %v1139 = vsel %vm206, %v892, 0
        %v1142 = vsel %vm206, %v893, 0
        %v1145 = vsel %vm206, %v894, 0
        %v1148 = vsel %vm206, %v895, 0
        %v1151 = vsel %vm206, %v896, 0
        %v1154 = vsel %vm206, %v897, 0
        %v1157 = vsel %vm206, %v898, 0
        %v1160 = vsel %vm206, %v899, 0
        %v1163 = vsel %vm206, %v900, 0
        %v1166 = vsel %vm255, %v902, 0
        %1168 = vmatprep.subr.mxu0 0.0
        %1169 = vmatpush1.msra.mxu0 %v1166
        %1170 = vmatprep.subr.mxu0 0.0
        %1171 = vmatpush1.msra.mxu0 0.0
        %1172 = vmatprep.subr.mxu0 0.0
        %1173 = vmatpush1.msra.mxu0 0.0
        %1174 = vmatprep.subr.mxu0 0.0
        %1175 = vmatpush1.msra.mxu0 0.0
        %1176 = vmatprep.subr.mxu0 0.0
        %1177 = vmatpush1.msra.mxu0 0.0
        %1178 = vmatprep.subr.mxu0 0.0
        %1179 = vmatpush1.msra.mxu0 0.0
        %1180 = vmatprep.subr.mxu0 0.0
        %1181 = vmatpush1.msra.mxu0 0.0
        %1182 = vmatprep.subr.mxu0 0.0
        %1183 = vmatpush1.msra.mxu0 0.0
        %1184 = vmatprep.subr.mxu0 0.0
        %1185 = vmatpush1.msra.mxu0 0.0
        %1186 = vmatprep.subr.mxu0 0.0
        %1187 = vmatpush1.msra.mxu0 0.0
        %1188 = vmatprep.subr.mxu0 0.0
        %1189 = vmatpush1.msra.mxu0 0.0
        %1190 = vmatprep.subr.mxu0 0.0
        %1191 = vmatpush1.msra.mxu0 0.0
        %1192 = vmatprep.subr.mxu0 0.0
        %1193 = vmatpush1.msra.mxu0 0.0
        %1194 = vmatprep.subr.mxu0 0.0
        %1195 = vmatpush1.msra.mxu0 0.0
        %1196 = vmatprep.subr.mxu0 0.0
        %1197 = vmatpush1.msra.mxu0 0.0
        %1198 = vmatprep.subr.mxu0 0.0
        %1199 = vmatpush1.msra.mxu0 0.0
        %1200 = vmatprep.subr.mxu0 0.0
        %1201 = vmatpush1.msra.mxu0 0.0
        %1202 = vmatprep.subr.mxu0 0.0
        %1203 = vmatpush1.msra.mxu0 0.0
        %1204 = vmatprep.subr.mxu0 0.0
        %1205 = vmatpush1.msra.mxu0 0.0
        %1206 = vmatprep.subr.mxu0 0.0
        %1207 = vmatpush1.msra.mxu0 0.0
        %1208 = vmatprep.subr.mxu0 0.0
        %1209 = vmatpush1.msra.mxu0 0.0
        %1210 = vmatprep.subr.mxu0 0.0
        %1211 = vmatpush1.msra.mxu0 0.0
        %1212 = vmatprep.subr.mxu0 0.0
        %1213 = vmatpush1.msra.mxu0 0.0
        %1214 = vmatprep.subr.mxu0 0.0
        %1215 = vmatpush1.msra.mxu0 0.0
        %1216 = vmatprep.subr.mxu0 0.0
        %1217 = vmatpush1.msra.mxu0 0.0
        %1218 = vmatprep.subr.mxu0 0.0
        %1219 = vmatpush1.msra.mxu0 0.0
        %1220 = vmatprep.subr.mxu0 0.0
        %1221 = vmatpush1.msra.mxu0 0.0
        %1222 = vmatprep.subr.mxu0 0.0
        %1223 = vmatpush1.msra.mxu0 0.0
        %1224 = vmatprep.subr.mxu0 0.0
        %1225 = vmatpush1.msra.mxu0 0.0
        %1226 = vmatprep.subr.mxu0 0.0
        %1227 = vmatpush1.msra.mxu0 0.0
        %1228 = vmatprep.subr.mxu0 0.0
        %1229 = vmatpush1.msra.mxu0 0.0
        %1230 = vmatprep.subr.mxu0 0.0
        %1231 = vmatpush1.msra.mxu0 0.0
        %1232 = vmatprep.mubr.f32.mxu0 0.0
        %1233 = vmatmul.mubr.f32.gmra.mrb[0].mxu0 %v1118
        %v1234 = vpop.f32.mrb[0].mxu0
        %v1235 = vadd.f32 %v1039, %v1234
        %v1236 = vpop.f32.mrb[0].mxu0
        %1237 = vmatprep.mubr.f32.mxu0 0.0
        %1238 = vmatmul.mubr.f32.gmra.mrb[0].mxu0 %v1121
        %v1239 = vpop.f32.mrb[0].mxu0
        %v1240 = vadd.f32 %v1044, %v1239
        %v1241 = vpop.f32.mrb[0].mxu0
        %1242 = vmatprep.mubr.f32.mxu0 0.0
        %1243 = vmatmul.mubr.f32.gmra.mrb[0].mxu0 %v1124
        %v1244 = vpop.f32.mrb[0].mxu0
        %v1245 = vadd.f32 %v1049, %v1244
        %v1246 = vpop.f32.mrb[0].mxu0
        %1247 = vmatprep.mubr.f32.mxu0 0.0
        %1248 = vmatmul.mubr.f32.gmra.mrb[0].mxu0 %v1127
        %v1249 = vpop.f32.mrb[0].mxu0
        %v1250 = vadd.f32 %v1054, %v1249
        %v1251 = vpop.f32.mrb[0].mxu0
        %1252 = vmatprep.mubr.f32.mxu0 0.0
        %1253 = vmatmul.mubr.f32.gmra.mrb[0].mxu0 %v1130
        %v1254 = vpop.f32.mrb[0].mxu0
        %v1255 = vadd.f32 %v1059, %v1254
        %v1256 = vpop.f32.mrb[0].mxu0
        %1257 = vmatprep.mubr.f32.mxu0 0.0
        %1258 = vmatmul.mubr.f32.gmra.mrb[0].mxu0 %v1133
        %v1259 = vpop.f32.mrb[0].mxu0
        %v1260 = vadd.f32 %v1064, %v1259
        %v1261 = vpop.f32.mrb[0].mxu0
        %1262 = vmatprep.mubr.f32.mxu0 0.0
        %1263 = vmatmul.mubr.f32.gmra.mrb[0].mxu0 %v1136
        %v1264 = vpop.f32.mrb[0].mxu0
        %v1265 = vadd.f32 %v1069, %v1264
        %v1266 = vpop.f32.mrb[0].mxu0
        %1267 = vmatprep.mubr.f32.mxu0 0.0
        %1268 = vmatmul.mubr.f32.gmra.mrb[0].mxu0 %v1139
        %v1269 = vpop.f32.mrb[0].mxu0
        %v1270 = vadd.f32 %v1074, %v1269
        %v1271 = vpop.f32.mrb[0].mxu0
        %1272 = vmatprep.mubr.f32.mxu0 0.0
        %1273 = vmatmul.mubr.f32.gmra.mrb[0].mxu0 %v1142
        %v1274 = vpop.f32.mrb[0].mxu0
        %v1275 = vadd.f32 %v1079, %v1274
        %v1276 = vpop.f32.mrb[0].mxu0
        %1277 = vmatprep.mubr.f32.mxu0 0.0
        %1278 = vmatmul.mubr.f32.gmra.mrb[0].mxu0 %v1145
        %v1279 = vpop.f32.mrb[0].mxu0
        %v1280 = vadd.f32 %v1084, %v1279
        %v1281 = vpop.f32.mrb[0].mxu0
        %1282 = vmatprep.mubr.f32.mxu0 0.0
        %1283 = vmatmul.mubr.f32.gmra.mrb[0].mxu0 %v1148
        %v1284 = vpop.f32.mrb[0].mxu0
        %v1285 = vadd.f32 %v1089, %v1284
        %v1286 = vpop.f32.mrb[0].mxu0
        %1287 = vmatprep.mubr.f32.mxu0 0.0
        %1288 = vmatmul.mubr.f32.gmra.mrb[0].mxu0 %v1151
        %v1289 = vpop.f32.mrb[0].mxu0
        %v1290 = vadd.f32 %v1094, %v1289
        %v1291 = vpop.f32.mrb[0].mxu0
        %1292 = vmatprep.mubr.f32.mxu0 0.0
        %1293 = vmatmul.mubr.f32.gmra.mrb[0].mxu0 %v1154
        %v1294 = vpop.f32.mrb[0].mxu0
        %v1295 = vadd.f32 %v1099, %v1294
        %v1296 = vpop.f32.mrb[0].mxu0
        %1297 = vmatprep.mubr.f32.mxu0 0.0
        %1298 = vmatmul.mubr.f32.gmra.mrb[0].mxu0 %v1157
        %v1299 = vpop.f32.mrb[0].mxu0
        %v1300 = vadd.f32 %v1104, %v1299
        %v1301 = vpop.f32.mrb[0].mxu0
        %1302 = vmatprep.mubr.f32.mxu0 0.0
        %1303 = vmatmul.mubr.f32.gmra.mrb[0].mxu0 %v1160
        %v1304 = vpop.f32.mrb[0].mxu0
        %v1305 = vadd.f32 %v1109, %v1304
        %v1306 = vpop.f32.mrb[0].mxu0
        %1307 = vmatprep.mubr.f32.mxu0 0.0
        %1308 = vmatmul.mubr.f32.gmra.mrb[0].mxu0 %v1163
        %v1309 = vpop.f32.mrb[0].mxu0
        %v1310 = vadd.f32 %v1114, %v1309
        %v1311 = vpop.f32.mrb[0].mxu0
        %1312 = vdwg.mxu0
        %v1313 = vadd.f32 %v1235, %v204
        %v1314 = vadd.f32 %v1240, %v204
        %v1315 = vadd.f32 %v1245, %v204
        %v1316 = vadd.f32 %v1250, %v204
        %v1317 = vadd.f32 %v1255, %v204
        %v1318 = vadd.f32 %v1260, %v204
        %v1319 = vadd.f32 %v1265, %v204
        %v1320 = vadd.f32 %v1270, %v204
        %v1321 = vadd.f32 %v1275, %v204
        %v1322 = vadd.f32 %v1280, %v204
        %v1323 = vadd.f32 %v1285, %v204
        %v1324 = vadd.f32 %v1290, %v204
        %v1325 = vadd.f32 %v1295, %v204
        %v1326 = vadd.f32 %v1300, %v204
        %v1327 = vadd.f32 %v1305, %v204
        %v1328 = vadd.f32 %v1310, %v204
        %s1329 = scalar_lea.vmem %s173, 256 [#allocation2]
        %1330 = vst.msk [vmem:[%s1329] sm:$0xff] %vm404, %v1313
        %1331 = vst.msk [vmem:[%s1329 + $0x8] sm:$0xff] %vm404, %v1314
        %1332 = vst.msk [vmem:[%s1329 + $0x10] sm:$0xff] %vm404, %v1315
        %1333 = vst.msk [vmem:[%s1329 + $0x18] sm:$0xff] %vm404, %v1316
        %1334 = vst.msk [vmem:[%s1329 + $0x20] sm:$0xff] %vm404, %v1317
        %1335 = vst.msk [vmem:[%s1329 + $0x28] sm:$0xff] %vm404, %v1318
        %1336 = vst.msk [vmem:[%s1329 + $0x30] sm:$0xff] %vm404, %v1319
        %1337 = vst.msk [vmem:[%s1329 + $0x38] sm:$0xff] %vm404, %v1320
        %1338 = vst.msk [vmem:[%s1329 + $0x40] sm:$0xff] %vm404, %v1321
        %1339 = vst.msk [vmem:[%s1329 + $0x48] sm:$0xff] %vm404, %v1322
        %1340 = vst.msk [vmem:[%s1329 + $0x50] sm:$0xff] %vm404, %v1323
        %1341 = vst.msk [vmem:[%s1329 + $0x58] sm:$0xff] %vm404, %v1324
        %1342 = vst.msk [vmem:[%s1329 + $0x60] sm:$0xff] %vm404, %v1325
        %1343 = vst.msk [vmem:[%s1329 + $0x68] sm:$0xff] %vm404, %v1326
        %1344 = vst.msk [vmem:[%s1329 + $0x70] sm:$0xff] %vm404, %v1327
        %1345 = vst.msk [vmem:[%s1329 + $0x78] sm:$0xff] %vm404, %v1328
        %v1346 = vld [vmem:[%s884 + $0x1] sm:$0xff]
        %v1347 = vld [vmem:[%s884 + $0x9] sm:$0xff]
        %v1348 = vld [vmem:[%s884 + $0x19] sm:$0xff]
        %v1349 = vld [vmem:[%s884 + $0x21] sm:$0xff]
        %v1350 = vld [vmem:[%s884 + $0x31] sm:$0xff]
        %v1351 = vld [vmem:[%s884 + $0x39] sm:$0xff]
        %v1352 = vld [vmem:[%s884 + $0x49] sm:$0xff]
        %v1353 = vld [vmem:[%s884 + $0x51] sm:$0xff]
        %v1354 = vld [vmem:[%s884 + $0x61] sm:$0xff]
        %v1355 = vld [vmem:[%s884 + $0x69] sm:$0xff]
        %v1356 = vld [vmem:[%s884 + $0x79] sm:$0xff]
        %v1357 = vld [vmem:[%s884 + $0x81] sm:$0xff]
        %v1358 = vld [vmem:[%s884 + $0x91] sm:$0xff]
        %v1359 = vld [vmem:[%s884 + $0x99] sm:$0xff]
        %v1360 = vld [vmem:[%s884 + $0xa9] sm:$0xff]
        %v1361 = vld [vmem:[%s884 + $0xb1] sm:$0xff]
        %s1362 = scalar_lea.vmem %s1, 48
        %v1363 = vld [vmem:[%s1362] sm:$0xf]
        %v1364 = vld [vmem:[%s884] sm:$0xff]
        %v1365 = vld [vmem:[%s884 + $0x8] sm:$0xff]
        %v1366 = vld [vmem:[%s884 + $0x18] sm:$0xff]
        %v1367 = vld [vmem:[%s884 + $0x20] sm:$0xff]
        %v1368 = vld [vmem:[%s884 + $0x30] sm:$0xff]
        %v1369 = vld [vmem:[%s884 + $0x38] sm:$0xff]
        %v1370 = vld [vmem:[%s884 + $0x48] sm:$0xff]
        %v1371 = vld [vmem:[%s884 + $0x50] sm:$0xff]
        %v1372 = vld [vmem:[%s884 + $0x60] sm:$0xff]
        %v1373 = vld [vmem:[%s884 + $0x68] sm:$0xff]
        %v1374 = vld [vmem:[%s884 + $0x78] sm:$0xff]
        %v1375 = vld [vmem:[%s884 + $0x80] sm:$0xff]
        %v1376 = vld [vmem:[%s884 + $0x90] sm:$0xff]
        %v1377 = vld [vmem:[%s884 + $0x98] sm:$0xff]
        %v1378 = vld [vmem:[%s884 + $0xa8] sm:$0xff]
        %v1379 = vld [vmem:[%s884 + $0xb0] sm:$0xff]
        %s1380 = scalar_lea.vmem %s1, 52
        %v1381 = vld [vmem:[%s1380] sm:$0xf]
        %v1383 = vsel %vm206, %v1364, 0
        %v1386 = vsel %vm206, %v1365, 0
        %v1389 = vsel %vm206, %v1366, 0
        %v1392 = vsel %vm206, %v1367, 0
        %v1395 = vsel %vm206, %v1368, 0
        %v1398 = vsel %vm206, %v1369, 0
        %v1401 = vsel %vm206, %v1370, 0
        %v1404 = vsel %vm206, %v1371, 0
        %v1407 = vsel %vm206, %v1372, 0
        %v1410 = vsel %vm206, %v1373, 0
        %v1413 = vsel %vm206, %v1374, 0
        %v1416 = vsel %vm206, %v1375, 0
        %v1419 = vsel %vm206, %v1376, 0
        %v1422 = vsel %vm206, %v1377, 0
        %v1425 = vsel %vm206, %v1378, 0
        %v1428 = vsel %vm206, %v1379, 0
        %v1431 = vsel %vm255, %v1381, 0
        %1433 = vmatprep.subr.mxu0 0.0
        %1434 = vmatpush1.msra.mxu0 %v1431
        %1435 = vmatprep.subr.mxu0 0.0
        %1436 = vmatpush1.msra.mxu0 0.0
        %1437 = vmatprep.subr.mxu0 0.0
        %1438 = vmatpush1.msra.mxu0 0.0
        %1439 = vmatprep.subr.mxu0 0.0
        %1440 = vmatpush1.msra.mxu0 0.0
        %1441 = vmatprep.subr.mxu0 0.0
        %1442 = vmatpush1.msra.mxu0 0.0
        %1443 = vmatprep.subr.mxu0 0.0
        %1444 = vmatpush1.msra.mxu0 0.0
        %1445 = vmatprep.subr.mxu0 0.0
        %1446 = vmatpush1.msra.mxu0 0.0
        %1447 = vmatprep.subr.mxu0 0.0
        %1448 = vmatpush1.msra.mxu0 0.0
        %1449 = vmatprep.subr.mxu0 0.0
        %1450 = vmatpush1.msra.mxu0 0.0
        %1451 = vmatprep.subr.mxu0 0.0
        %1452 = vmatpush1.msra.mxu0 0.0
        %1453 = vmatprep.subr.mxu0 0.0
        %1454 = vmatpush1.msra.mxu0 0.0
        %1455 = vmatprep.subr.mxu0 0.0
        %1456 = vmatpush1.msra.mxu0 0.0
        %1457 = vmatprep.subr.mxu0 0.0
        %1458 = vmatpush1.msra.mxu0 0.0
        %1459 = vmatprep.subr.mxu0 0.0
        %1460 = vmatpush1.msra.mxu0 0.0
        %1461 = vmatprep.subr.mxu0 0.0
        %1462 = vmatpush1.msra.mxu0 0.0
        %1463 = vmatprep.subr.mxu0 0.0
        %1464 = vmatpush1.msra.mxu0 0.0
        %1465 = vmatprep.subr.mxu0 0.0
        %1466 = vmatpush1.msra.mxu0 0.0
        %1467 = vmatprep.subr.mxu0 0.0
        %1468 = vmatpush1.msra.mxu0 0.0
        %1469 = vmatprep.subr.mxu0 0.0
        %1470 = vmatpush1.msra.mxu0 0.0
        %1471 = vmatprep.subr.mxu0 0.0
        %1472 = vmatpush1.msra.mxu0 0.0
        %1473 = vmatprep.subr.mxu0 0.0
        %1474 = vmatpush1.msra.mxu0 0.0
        %1475 = vmatprep.subr.mxu0 0.0
        %1476 = vmatpush1.msra.mxu0 0.0
        %1477 = vmatprep.subr.mxu0 0.0
        %1478 = vmatpush1.msra.mxu0 0.0
        %1479 = vmatprep.subr.mxu0 0.0
        %1480 = vmatpush1.msra.mxu0 0.0
        %1481 = vmatprep.subr.mxu0 0.0
        %1482 = vmatpush1.msra.mxu0 0.0
        %1483 = vmatprep.subr.mxu0 0.0
        %1484 = vmatpush1.msra.mxu0 0.0
        %1485 = vmatprep.subr.mxu0 0.0
        %1486 = vmatpush1.msra.mxu0 0.0
        %1487 = vmatprep.subr.mxu0 0.0
        %1488 = vmatpush1.msra.mxu0 0.0
        %1489 = vmatprep.subr.mxu0 0.0
        %1490 = vmatpush1.msra.mxu0 0.0
        %1491 = vmatprep.subr.mxu0 0.0
        %1492 = vmatpush1.msra.mxu0 0.0
        %1493 = vmatprep.subr.mxu0 0.0
        %1494 = vmatpush1.msra.mxu0 0.0
        %1495 = vmatprep.subr.mxu0 0.0
        %1496 = vmatpush1.msra.mxu0 0.0
        %1497 = vmatprep.mubr.f32.mxu0 0.0
        %1498 = vmatmul.mubr.f32.gmra.mrb[0].mxu0 %v1383
        %v1499 = vpop.f32.mrb[0].mxu0
        %v1500 = vadd.f32 0.0, %v1499
        %v1501 = vpop.f32.mrb[0].mxu0
        %1502 = vmatprep.mubr.f32.mxu0 0.0
        %1503 = vmatmul.mubr.f32.gmra.mrb[0].mxu0 %v1386
        %v1504 = vpop.f32.mrb[0].mxu0
        %v1505 = vadd.f32 0.0, %v1504
        %v1506 = vpop.f32.mrb[0].mxu0
        %1507 = vmatprep.mubr.f32.mxu0 0.0
        %1508 = vmatmul.mubr.f32.gmra.mrb[0].mxu0 %v1389
        %v1509 = vpop.f32.mrb[0].mxu0
        %v1510 = vadd.f32 0.0, %v1509
        %v1511 = vpop.f32.mrb[0].mxu0
        %1512 = vmatprep.mubr.f32.mxu0 0.0
        %1513 = vmatmul.mubr.f32.gmra.mrb[0].mxu0 %v1392
        %v1514 = vpop.f32.mrb[0].mxu0
        %v1515 = vadd.f32 0.0, %v1514
        %v1516 = vpop.f32.mrb[0].mxu0
        %1517 = vmatprep.mubr.f32.mxu0 0.0
        %1518 = vmatmul.mubr.f32.gmra.mrb[0].mxu0 %v1395
        %v1519 = vpop.f32.mrb[0].mxu0
        %v1520 = vadd.f32 0.0, %v1519
        %v1521 = vpop.f32.mrb[0].mxu0
        %1522 = vmatprep.mubr.f32.mxu0 0.0
        %1523 = vmatmul.mubr.f32.gmra.mrb[0].mxu0 %v1398
        %v1524 = vpop.f32.mrb[0].mxu0
        %v1525 = vadd.f32 0.0, %v1524
        %v1526 = vpop.f32.mrb[0].mxu0
        %1527 = vmatprep.mubr.f32.mxu0 0.0
        %1528 = vmatmul.mubr.f32.gmra.mrb[0].mxu0 %v1401
        %v1529 = vpop.f32.mrb[0].mxu0
        %v1530 = vadd.f32 0.0, %v1529
        %v1531 = vpop.f32.mrb[0].mxu0
        %1532 = vmatprep.mubr.f32.mxu0 0.0
        %1533 = vmatmul.mubr.f32.gmra.mrb[0].mxu0 %v1404
        %v1534 = vpop.f32.mrb[0].mxu0
        %v1535 = vadd.f32 0.0, %v1534
        %v1536 = vpop.f32.mrb[0].mxu0
        %1537 = vmatprep.mubr.f32.mxu0 0.0
        %1538 = vmatmul.mubr.f32.gmra.mrb[0].mxu0 %v1407
        %v1539 = vpop.f32.mrb[0].mxu0
        %v1540 = vadd.f32 0.0, %v1539
        %v1541 = vpop.f32.mrb[0].mxu0
        %1542 = vmatprep.mubr.f32.mxu0 0.0
        %1543 = vmatmul.mubr.f32.gmra.mrb[0].mxu0 %v1410
        %v1544 = vpop.f32.mrb[0].mxu0
        %v1545 = vadd.f32 0.0, %v1544
        %v1546 = vpop.f32.mrb[0].mxu0
        %1547 = vmatprep.mubr.f32.mxu0 0.0
        %1548 = vmatmul.mubr.f32.gmra.mrb[0].mxu0 %v1413
        %v1549 = vpop.f32.mrb[0].mxu0
        %v1550 = vadd.f32 0.0, %v1549
        %v1551 = vpop.f32.mrb[0].mxu0
        %1552 = vmatprep.mubr.f32.mxu0 0.0
        %1553 = vmatmul.mubr.f32.gmra.mrb[0].mxu0 %v1416
        %v1554 = vpop.f32.mrb[0].mxu0
        %v1555 = vadd.f32 0.0, %v1554
        %v1556 = vpop.f32.mrb[0].mxu0
        %1557 = vmatprep.mubr.f32.mxu0 0.0
        %1558 = vmatmul.mubr.f32.gmra.mrb[0].mxu0 %v1419
        %v1559 = vpop.f32.mrb[0].mxu0
        %v1560 = vadd.f32 0.0, %v1559
        %v1561 = vpop.f32.mrb[0].mxu0
        %1562 = vmatprep.mubr.f32.mxu0 0.0
        %1563 = vmatmul.mubr.f32.gmra.mrb[0].mxu0 %v1422
        %v1564 = vpop.f32.mrb[0].mxu0
        %v1565 = vadd.f32 0.0, %v1564
        %v1566 = vpop.f32.mrb[0].mxu0
        %1567 = vmatprep.mubr.f32.mxu0 0.0
        %1568 = vmatmul.mubr.f32.gmra.mrb[0].mxu0 %v1425
        %v1569 = vpop.f32.mrb[0].mxu0
        %v1570 = vadd.f32 0.0, %v1569
        %v1571 = vpop.f32.mrb[0].mxu0
        %1572 = vmatprep.mubr.f32.mxu0 0.0
        %1573 = vmatmul.mubr.f32.gmra.mrb[0].mxu0 %v1428
        %v1574 = vpop.f32.mrb[0].mxu0
        %v1575 = vadd.f32 0.0, %v1574
        %v1576 = vpop.f32.mrb[0].mxu0
        %1577 = vdwg.mxu0
        %v1579 = vsel %vm206, %v1346, 0
        %v1582 = vsel %vm206, %v1347, 0
        %v1585 = vsel %vm206, %v1348, 0
        %v1588 = vsel %vm206, %v1349, 0
        %v1591 = vsel %vm206, %v1350, 0
        %v1594 = vsel %vm206, %v1351, 0
        %v1597 = vsel %vm206, %v1352, 0
        %v1600 = vsel %vm206, %v1353, 0
        %v1603 = vsel %vm206, %v1354, 0
        %v1606 = vsel %vm206, %v1355, 0
        %v1609 = vsel %vm206, %v1356, 0
        %v1612 = vsel %vm206, %v1357, 0
        %v1615 = vsel %vm206, %v1358, 0
        %v1618 = vsel %vm206, %v1359, 0
        %v1621 = vsel %vm206, %v1360, 0
        %v1624 = vsel %vm206, %v1361, 0
        %v1627 = vsel %vm255, %v1363, 0
        %1629 = vmatprep.subr.mxu0 0.0
        %1630 = vmatpush1.msra.mxu0 %v1627
        %1631 = vmatprep.subr.mxu0 0.0
        %1632 = vmatpush1.msra.mxu0 0.0
        %1633 = vmatprep.subr.mxu0 0.0
        %1634 = vmatpush1.msra.mxu0 0.0
        %1635 = vmatprep.subr.mxu0 0.0
        %1636 = vmatpush1.msra.mxu0 0.0
        %1637 = vmatprep.subr.mxu0 0.0
        %1638 = vmatpush1.msra.mxu0 0.0
        %1639 = vmatprep.subr.mxu0 0.0
        %1640 = vmatpush1.msra.mxu0 0.0
        %1641 = vmatprep.subr.mxu0 0.0
        %1642 = vmatpush1.msra.mxu0 0.0
        %1643 = vmatprep.subr.mxu0 0.0
        %1644 = vmatpush1.msra.mxu0 0.0
        %1645 = vmatprep.subr.mxu0 0.0
        %1646 = vmatpush1.msra.mxu0 0.0
        %1647 = vmatprep.subr.mxu0 0.0
        %1648 = vmatpush1.msra.mxu0 0.0
        %1649 = vmatprep.subr.mxu0 0.0
        %1650 = vmatpush1.msra.mxu0 0.0
        %1651 = vmatprep.subr.mxu0 0.0
        %1652 = vmatpush1.msra.mxu0 0.0
        %1653 = vmatprep.subr.mxu0 0.0
        %1654 = vmatpush1.msra.mxu0 0.0
        %1655 = vmatprep.subr.mxu0 0.0
        %1656 = vmatpush1.msra.mxu0 0.0
        %1657 = vmatprep.subr.mxu0 0.0
        %1658 = vmatpush1.msra.mxu0 0.0
        %1659 = vmatprep.subr.mxu0 0.0
        %1660 = vmatpush1.msra.mxu0 0.0
        %1661 = vmatprep.subr.mxu0 0.0
        %1662 = vmatpush1.msra.mxu0 0.0
        %1663 = vmatprep.subr.mxu0 0.0
        %1664 = vmatpush1.msra.mxu0 0.0
        %1665 = vmatprep.subr.mxu0 0.0
        %1666 = vmatpush1.msra.mxu0 0.0
        %1667 = vmatprep.subr.mxu0 0.0
        %1668 = vmatpush1.msra.mxu0 0.0
        %1669 = vmatprep.subr.mxu0 0.0
        %1670 = vmatpush1.msra.mxu0 0.0
        %1671 = vmatprep.subr.mxu0 0.0
        %1672 = vmatpush1.msra.mxu0 0.0
        %1673 = vmatprep.subr.mxu0 0.0
        %1674 = vmatpush1.msra.mxu0 0.0
        %1675 = vmatprep.subr.mxu0 0.0
        %1676 = vmatpush1.msra.mxu0 0.0
        %1677 = vmatprep.subr.mxu0 0.0
        %1678 = vmatpush1.msra.mxu0 0.0
        %1679 = vmatprep.subr.mxu0 0.0
        %1680 = vmatpush1.msra.mxu0 0.0
        %1681 = vmatprep.subr.mxu0 0.0
        %1682 = vmatpush1.msra.mxu0 0.0
        %1683 = vmatprep.subr.mxu0 0.0
        %1684 = vmatpush1.msra.mxu0 0.0
        %1685 = vmatprep.subr.mxu0 0.0
        %1686 = vmatpush1.msra.mxu0 0.0
        %1687 = vmatprep.subr.mxu0 0.0
        %1688 = vmatpush1.msra.mxu0 0.0
        %1689 = vmatprep.subr.mxu0 0.0
        %1690 = vmatpush1.msra.mxu0 0.0
        %1691 = vmatprep.subr.mxu0 0.0
        %1692 = vmatpush1.msra.mxu0 0.0
        %1693 = vmatprep.mubr.f32.mxu0 0.0
        %1694 = vmatmul.mubr.f32.gmra.mrb[0].mxu0 %v1579
        %v1695 = vpop.f32.mrb[0].mxu0
        %v1696 = vadd.f32 %v1500, %v1695
        %v1697 = vpop.f32.mrb[0].mxu0
        %1698 = vmatprep.mubr.f32.mxu0 0.0
        %1699 = vmatmul.mubr.f32.gmra.mrb[0].mxu0 %v1582
        %v1700 = vpop.f32.mrb[0].mxu0
        %v1701 = vadd.f32 %v1505, %v1700
        %v1702 = vpop.f32.mrb[0].mxu0
        %1703 = vmatprep.mubr.f32.mxu0 0.0
        %1704 = vmatmul.mubr.f32.gmra.mrb[0].mxu0 %v1585
        %v1705 = vpop.f32.mrb[0].mxu0
        %v1706 = vadd.f32 %v1510, %v1705
        %v1707 = vpop.f32.mrb[0].mxu0
        %1708 = vmatprep.mubr.f32.mxu0 0.0
        %1709 = vmatmul.mubr.f32.gmra.mrb[0].mxu0 %v1588
        %v1710 = vpop.f32.mrb[0].mxu0
        %v1711 = vadd.f32 %v1515, %v1710
        %v1712 = vpop.f32.mrb[0].mxu0
        %1713 = vmatprep.mubr.f32.mxu0 0.0
        %1714 = vmatmul.mubr.f32.gmra.mrb[0].mxu0 %v1591
        %v1715 = vpop.f32.mrb[0].mxu0
        %v1716 = vadd.f32 %v1520, %v1715
        %v1717 = vpop.f32.mrb[0].mxu0
        %1718 = vmatprep.mubr.f32.mxu0 0.0
        %1719 = vmatmul.mubr.f32.gmra.mrb[0].mxu0 %v1594
        %v1720 = vpop.f32.mrb[0].mxu0
        %v1721 = vadd.f32 %v1525, %v1720
        %v1722 = vpop.f32.mrb[0].mxu0
        %1723 = vmatprep.mubr.f32.mxu0 0.0
        %1724 = vmatmul.mubr.f32.gmra.mrb[0].mxu0 %v1597
        %v1725 = vpop.f32.mrb[0].mxu0
        %v1726 = vadd.f32 %v1530, %v1725
        %v1727 = vpop.f32.mrb[0].mxu0
        %1728 = vmatprep.mubr.f32.mxu0 0.0
        %1729 = vmatmul.mubr.f32.gmra.mrb[0].mxu0 %v1600
        %v1730 = vpop.f32.mrb[0].mxu0
        %v1731 = vadd.f32 %v1535, %v1730
        %v1732 = vpop.f32.mrb[0].mxu0
        %1733 = vmatprep.mubr.f32.mxu0 0.0
        %1734 = vmatmul.mubr.f32.gmra.mrb[0].mxu0 %v1603
        %v1735 = vpop.f32.mrb[0].mxu0
        %v1736 = vadd.f32 %v1540, %v1735
        %v1737 = vpop.f32.mrb[0].mxu0
        %1738 = vmatprep.mubr.f32.mxu0 0.0
        %1739 = vmatmul.mubr.f32.gmra.mrb[0].mxu0 %v1606
        %v1740 = vpop.f32.mrb[0].mxu0
        %v1741 = vadd.f32 %v1545, %v1740
        %v1742 = vpop.f32.mrb[0].mxu0
        %1743 = vmatprep.mubr.f32.mxu0 0.0
        %1744 = vmatmul.mubr.f32.gmra.mrb[0].mxu0 %v1609
        %v1745 = vpop.f32.mrb[0].mxu0
        %v1746 = vadd.f32 %v1550, %v1745
        %v1747 = vpop.f32.mrb[0].mxu0
        %1748 = vmatprep.mubr.f32.mxu0 0.0
        %1749 = vmatmul.mubr.f32.gmra.mrb[0].mxu0 %v1612
        %v1750 = vpop.f32.mrb[0].mxu0
        %v1751 = vadd.f32 %v1555, %v1750
        %v1752 = vpop.f32.mrb[0].mxu0
        %1753 = vmatprep.mubr.f32.mxu0 0.0
        %1754 = vmatmul.mubr.f32.gmra.mrb[0].mxu0 %v1615
        %v1755 = vpop.f32.mrb[0].mxu0
        %v1756 = vadd.f32 %v1560, %v1755
        %v1757 = vpop.f32.mrb[0].mxu0
        %1758 = vmatprep.mubr.f32.mxu0 0.0
        %1759 = vmatmul.mubr.f32.gmra.mrb[0].mxu0 %v1618
        %v1760 = vpop.f32.mrb[0].mxu0
        %v1761 = vadd.f32 %v1565, %v1760
        %v1762 = vpop.f32.mrb[0].mxu0
        %1763 = vmatprep.mubr.f32.mxu0 0.0
        %1764 = vmatmul.mubr.f32.gmra.mrb[0].mxu0 %v1621
        %v1765 = vpop.f32.mrb[0].mxu0
        %v1766 = vadd.f32 %v1570, %v1765
        %v1767 = vpop.f32.mrb[0].mxu0
        %1768 = vmatprep.mubr.f32.mxu0 0.0
        %1769 = vmatmul.mubr.f32.gmra.mrb[0].mxu0 %v1624
        %v1770 = vpop.f32.mrb[0].mxu0
        %v1771 = vadd.f32 %v1575, %v1770
        %v1772 = vpop.f32.mrb[0].mxu0
        %1773 = vdwg.mxu0
        %v1774 = vld [vmem:[%s182 + $0x1] sm:$0xff]
        %v1775 = vld [vmem:[%s182 + $0x9] sm:$0xff]
        %v1776 = vld [vmem:[%s182 + $0x19] sm:$0xff]
        %v1777 = vld [vmem:[%s182 + $0x21] sm:$0xff]
        %v1778 = vld [vmem:[%s182 + $0x31] sm:$0xff]
        %v1779 = vld [vmem:[%s182 + $0x39] sm:$0xff]
        %v1780 = vld [vmem:[%s182 + $0x49] sm:$0xff]
        %v1781 = vld [vmem:[%s182 + $0x51] sm:$0xff]
        %v1782 = vld [vmem:[%s182 + $0x61] sm:$0xff]
        %v1783 = vld [vmem:[%s182 + $0x69] sm:$0xff]
        %v1784 = vld [vmem:[%s182 + $0x79] sm:$0xff]
        %v1785 = vld [vmem:[%s182 + $0x81] sm:$0xff]
        %v1786 = vld [vmem:[%s182 + $0x91] sm:$0xff]
        %v1787 = vld [vmem:[%s182 + $0x99] sm:$0xff]
        %v1788 = vld [vmem:[%s182 + $0xa9] sm:$0xff]
        %v1789 = vld [vmem:[%s182 + $0xb1] sm:$0xff]
        %s1790 = scalar_lea.vmem %s1, 56
        %v1791 = vld [vmem:[%s1790] sm:$0xf]
        %v1793 = vsel %vm206, %v1774, 0
        %v1796 = vsel %vm206, %v1775, 0
        %v1799 = vsel %vm206, %v1776, 0
        %v1802 = vsel %vm206, %v1777, 0
        %v1805 = vsel %vm206, %v1778, 0
        %v1808 = vsel %vm206, %v1779, 0
        %v1811 = vsel %vm206, %v1780, 0
        %v1814 = vsel %vm206, %v1781, 0
        %v1817 = vsel %vm206, %v1782, 0
        %v1820 = vsel %vm206, %v1783, 0
        %v1823 = vsel %vm206, %v1784, 0
        %v1826 = vsel %vm206, %v1785, 0
        %v1829 = vsel %vm206, %v1786, 0
        %v1832 = vsel %vm206, %v1787, 0
        %v1835 = vsel %vm206, %v1788, 0
        %v1838 = vsel %vm206, %v1789, 0
        %v1841 = vsel %vm255, %v1791, 0
        %1843 = vmatprep.subr.mxu0 0.0
        %1844 = vmatpush1.msra.mxu0 %v1841
        %1845 = vmatprep.subr.mxu0 0.0
        %1846 = vmatpush1.msra.mxu0 0.0
        %1847 = vmatprep.subr.mxu0 0.0
        %1848 = vmatpush1.msra.mxu0 0.0
        %1849 = vmatprep.subr.mxu0 0.0
        %1850 = vmatpush1.msra.mxu0 0.0
        %1851 = vmatprep.subr.mxu0 0.0
        %1852 = vmatpush1.msra.mxu0 0.0
        %1853 = vmatprep.subr.mxu0 0.0
        %1854 = vmatpush1.msra.mxu0 0.0
        %1855 = vmatprep.subr.mxu0 0.0
        %1856 = vmatpush1.msra.mxu0 0.0
        %1857 = vmatprep.subr.mxu0 0.0
        %1858 = vmatpush1.msra.mxu0 0.0
        %1859 = vmatprep.subr.mxu0 0.0
        %1860 = vmatpush1.msra.mxu0 0.0
        %1861 = vmatprep.subr.mxu0 0.0
        %1862 = vmatpush1.msra.mxu0 0.0
        %1863 = vmatprep.subr.mxu0 0.0
        %1864 = vmatpush1.msra.mxu0 0.0
        %1865 = vmatprep.subr.mxu0 0.0
        %1866 = vmatpush1.msra.mxu0 0.0
        %1867 = vmatprep.subr.mxu0 0.0
        %1868 = vmatpush1.msra.mxu0 0.0
        %1869 = vmatprep.subr.mxu0 0.0
        %1870 = vmatpush1.msra.mxu0 0.0
        %1871 = vmatprep.subr.mxu0 0.0
        %1872 = vmatpush1.msra.mxu0 0.0
        %1873 = vmatprep.subr.mxu0 0.0
        %1874 = vmatpush1.msra.mxu0 0.0
        %1875 = vmatprep.subr.mxu0 0.0
        %1876 = vmatpush1.msra.mxu0 0.0
        %1877 = vmatprep.subr.mxu0 0.0
        %1878 = vmatpush1.msra.mxu0 0.0
        %1879 = vmatprep.subr.mxu0 0.0
        %1880 = vmatpush1.msra.mxu0 0.0
        %1881 = vmatprep.subr.mxu0 0.0
        %1882 = vmatpush1.msra.mxu0 0.0
        %1883 = vmatprep.subr.mxu0 0.0
        %1884 = vmatpush1.msra.mxu0 0.0
        %1885 = vmatprep.subr.mxu0 0.0
        %1886 = vmatpush1.msra.mxu0 0.0
        %1887 = vmatprep.subr.mxu0 0.0
        %1888 = vmatpush1.msra.mxu0 0.0
        %1889 = vmatprep.subr.mxu0 0.0
        %1890 = vmatpush1.msra.mxu0 0.0
        %1891 = vmatprep.subr.mxu0 0.0
        %1892 = vmatpush1.msra.mxu0 0.0
        %1893 = vmatprep.subr.mxu0 0.0
        %1894 = vmatpush1.msra.mxu0 0.0
        %1895 = vmatprep.subr.mxu0 0.0
        %1896 = vmatpush1.msra.mxu0 0.0
        %1897 = vmatprep.subr.mxu0 0.0
        %1898 = vmatpush1.msra.mxu0 0.0
        %1899 = vmatprep.subr.mxu0 0.0
        %1900 = vmatpush1.msra.mxu0 0.0
        %1901 = vmatprep.subr.mxu0 0.0
        %1902 = vmatpush1.msra.mxu0 0.0
        %1903 = vmatprep.subr.mxu0 0.0
        %1904 = vmatpush1.msra.mxu0 0.0
        %1905 = vmatprep.subr.mxu0 0.0
        %1906 = vmatpush1.msra.mxu0 0.0
        %1907 = vmatprep.mubr.f32.mxu0 0.0
        %1908 = vmatmul.mubr.f32.gmra.mrb[0].mxu0 %v1793
        %v1909 = vpop.f32.mrb[0].mxu0
        %v1910 = vadd.f32 0.0, %v1909
        %v1911 = vpop.f32.mrb[0].mxu0
        %1912 = vmatprep.mubr.f32.mxu0 0.0
        %1913 = vmatmul.mubr.f32.gmra.mrb[0].mxu0 %v1796
        %v1914 = vpop.f32.mrb[0].mxu0
        %v1915 = vadd.f32 0.0, %v1914
        %v1916 = vpop.f32.mrb[0].mxu0
        %1917 = vmatprep.mubr.f32.mxu0 0.0
        %1918 = vmatmul.mubr.f32.gmra.mrb[0].mxu0 %v1799
        %v1919 = vpop.f32.mrb[0].mxu0
        %v1920 = vadd.f32 0.0, %v1919
        %v1921 = vpop.f32.mrb[0].mxu0
        %1922 = vmatprep.mubr.f32.mxu0 0.0
        %1923 = vmatmul.mubr.f32.gmra.mrb[0].mxu0 %v1802
        %v1924 = vpop.f32.mrb[0].mxu0
        %v1925 = vadd.f32 0.0, %v1924
        %v1926 = vpop.f32.mrb[0].mxu0
        %1927 = vmatprep.mubr.f32.mxu0 0.0
        %1928 = vmatmul.mubr.f32.gmra.mrb[0].mxu0 %v1805
        %v1929 = vpop.f32.mrb[0].mxu0
        %v1930 = vadd.f32 0.0, %v1929
        %v1931 = vpop.f32.mrb[0].mxu0
        %1932 = vmatprep.mubr.f32.mxu0 0.0
        %1933 = vmatmul.mubr.f32.gmra.mrb[0].mxu0 %v1808
        %v1934 = vpop.f32.mrb[0].mxu0
        %v1935 = vadd.f32 0.0, %v1934
        %v1936 = vpop.f32.mrb[0].mxu0
        %1937 = vmatprep.mubr.f32.mxu0 0.0
        %1938 = vmatmul.mubr.f32.gmra.mrb[0].mxu0 %v1811
        %v1939 = vpop.f32.mrb[0].mxu0
        %v1940 = vadd.f32 0.0, %v1939
        %v1941 = vpop.f32.mrb[0].mxu0
        %1942 = vmatprep.mubr.f32.mxu0 0.0
        %1943 = vmatmul.mubr.f32.gmra.mrb[0].mxu0 %v1814
        %v1944 = vpop.f32.mrb[0].mxu0
        %v1945 = vadd.f32 0.0, %v1944
        %v1946 = vpop.f32.mrb[0].mxu0
        %1947 = vmatprep.mubr.f32.mxu0 0.0
        %1948 = vmatmul.mubr.f32.gmra.mrb[0].mxu0 %v1817
        %v1949 = vpop.f32.mrb[0].mxu0
        %v1950 = vadd.f32 0.0, %v1949
        %v1951 = vpop.f32.mrb[0].mxu0
        %1952 = vmatprep.mubr.f32.mxu0 0.0
        %1953 = vmatmul.mubr.f32.gmra.mrb[0].mxu0 %v1820
        %v1954 = vpop.f32.mrb[0].mxu0
        %v1955 = vadd.f32 0.0, %v1954
        %v1956 = vpop.f32.mrb[0].mxu0
        %1957 = vmatprep.mubr.f32.mxu0 0.0
        %1958 = vmatmul.mubr.f32.gmra.mrb[0].mxu0 %v1823
        %v1959 = vpop.f32.mrb[0].mxu0
        %v1960 = vadd.f32 0.0, %v1959
        %v1961 = vpop.f32.mrb[0].mxu0
        %1962 = vmatprep.mubr.f32.mxu0 0.0
        %1963 = vmatmul.mubr.f32.gmra.mrb[0].mxu0 %v1826
        %v1964 = vpop.f32.mrb[0].mxu0
        %v1965 = vadd.f32 0.0, %v1964
        %v1966 = vpop.f32.mrb[0].mxu0
        %1967 = vmatprep.mubr.f32.mxu0 0.0
        %1968 = vmatmul.mubr.f32.gmra.mrb[0].mxu0 %v1829
        %v1969 = vpop.f32.mrb[0].mxu0
        %v1970 = vadd.f32 0.0, %v1969
        %v1971 = vpop.f32.mrb[0].mxu0
        %1972 = vmatprep.mubr.f32.mxu0 0.0
        %1973 = vmatmul.mubr.f32.gmra.mrb[0].mxu0 %v1832
        %v1974 = vpop.f32.mrb[0].mxu0
        %v1975 = vadd.f32 0.0, %v1974
        %v1976 = vpop.f32.mrb[0].mxu0
        %1977 = vmatprep.mubr.f32.mxu0 0.0
        %1978 = vmatmul.mubr.f32.gmra.mrb[0].mxu0 %v1835
        %v1979 = vpop.f32.mrb[0].mxu0
        %v1980 = vadd.f32 0.0, %v1979
        %v1981 = vpop.f32.mrb[0].mxu0
        %1982 = vmatprep.mubr.f32.mxu0 0.0
        %1983 = vmatmul.mubr.f32.gmra.mrb[0].mxu0 %v1838
        %v1984 = vpop.f32.mrb[0].mxu0
        %v1985 = vadd.f32 0.0, %v1984
        %v1986 = vpop.f32.mrb[0].mxu0
        %1987 = vdwg.mxu0
        %v1988 = vadd.f32 %v1696, %v1910
        %v1989 = vadd.f32 %v1701, %v1915
        %v1990 = vadd.f32 %v1706, %v1920
        %v1991 = vadd.f32 %v1711, %v1925
        %v1992 = vadd.f32 %v1716, %v1930
        %v1993 = vadd.f32 %v1721, %v1935
        %v1994 = vadd.f32 %v1726, %v1940
        %v1995 = vadd.f32 %v1731, %v1945
        %v1996 = vadd.f32 %v1736, %v1950
        %v1997 = vadd.f32 %v1741, %v1955
        %v1998 = vadd.f32 %v1746, %v1960
        %v1999 = vadd.f32 %v1751, %v1965
        %v2000 = vadd.f32 %v1756, %v1970
        %v2001 = vadd.f32 %v1761, %v1975
        %v2002 = vadd.f32 %v1766, %v1980
        %v2003 = vadd.f32 %v1771, %v1985
        %v2004 = vld [vmem:[%s182] sm:$0xff]
        %v2005 = vld [vmem:[%s182 + $0x8] sm:$0xff]
        %v2006 = vld [vmem:[%s182 + $0x18] sm:$0xff]
        %v2007 = vld [vmem:[%s182 + $0x20] sm:$0xff]
        %v2008 = vld [vmem:[%s182 + $0x30] sm:$0xff]
        %v2009 = vld [vmem:[%s182 + $0x38] sm:$0xff]
        %v2010 = vld [vmem:[%s182 + $0x48] sm:$0xff]
        %v2011 = vld [vmem:[%s182 + $0x50] sm:$0xff]
        %v2012 = vld [vmem:[%s182 + $0x60] sm:$0xff]
        %v2013 = vld [vmem:[%s182 + $0x68] sm:$0xff]
        %v2014 = vld [vmem:[%s182 + $0x78] sm:$0xff]
        %v2015 = vld [vmem:[%s182 + $0x80] sm:$0xff]
        %v2016 = vld [vmem:[%s182 + $0x90] sm:$0xff]
        %v2017 = vld [vmem:[%s182 + $0x98] sm:$0xff]
        %v2018 = vld [vmem:[%s182 + $0xa8] sm:$0xff]
        %v2019 = vld [vmem:[%s182 + $0xb0] sm:$0xff]
        %s2020 = scalar_lea.vmem %s1, 60
        %v2021 = vld [vmem:[%s2020] sm:$0xf]
        %v2023 = vsel %vm206, %v2004, 0
        %v2026 = vsel %vm206, %v2005, 0
        %v2029 = vsel %vm206, %v2006, 0
        %v2032 = vsel %vm206, %v2007, 0
        %v2035 = vsel %vm206, %v2008, 0
        %v2038 = vsel %vm206, %v2009, 0
        %v2041 = vsel %vm206, %v2010, 0
        %v2044 = vsel %vm206, %v2011, 0
        %v2047 = vsel %vm206, %v2012, 0
        %v2050 = vsel %vm206, %v2013, 0
        %v2053 = vsel %vm206, %v2014, 0
        %v2056 = vsel %vm206, %v2015, 0
        %v2059 = vsel %vm206, %v2016, 0
        %v2062 = vsel %vm206, %v2017, 0
        %v2065 = vsel %vm206, %v2018, 0
        %v2068 = vsel %vm206, %v2019, 0
        %v2071 = vsel %vm255, %v2021, 0
        %2073 = vmatprep.subr.mxu0 0.0
        %2074 = vmatpush1.msra.mxu0 %v2071
        %2075 = vmatprep.subr.mxu0 0.0
        %2076 = vmatpush1.msra.mxu0 0.0
        %2077 = vmatprep.subr.mxu0 0.0
        %2078 = vmatpush1.msra.mxu0 0.0
        %2079 = vmatprep.subr.mxu0 0.0
        %2080 = vmatpush1.msra.mxu0 0.0
        %2081 = vmatprep.subr.mxu0 0.0
        %2082 = vmatpush1.msra.mxu0 0.0
        %2083 = vmatprep.subr.mxu0 0.0
        %2084 = vmatpush1.msra.mxu0 0.0
        %2085 = vmatprep.subr.mxu0 0.0
        %2086 = vmatpush1.msra.mxu0 0.0
        %2087 = vmatprep.subr.mxu0 0.0
        %2088 = vmatpush1.msra.mxu0 0.0
        %2089 = vmatprep.subr.mxu0 0.0
        %2090 = vmatpush1.msra.mxu0 0.0
        %2091 = vmatprep.subr.mxu0 0.0
        %2092 = vmatpush1.msra.mxu0 0.0
        %2093 = vmatprep.subr.mxu0 0.0
        %2094 = vmatpush1.msra.mxu0 0.0
        %2095 = vmatprep.subr.mxu0 0.0
        %2096 = vmatpush1.msra.mxu0 0.0
        %2097 = vmatprep.subr.mxu0 0.0
        %2098 = vmatpush1.msra.mxu0 0.0
        %2099 = vmatprep.subr.mxu0 0.0
        %2100 = vmatpush1.msra.mxu0 0.0
        %2101 = vmatprep.subr.mxu0 0.0
        %2102 = vmatpush1.msra.mxu0 0.0
        %2103 = vmatprep.subr.mxu0 0.0
        %2104 = vmatpush1.msra.mxu0 0.0
        %2105 = vmatprep.subr.mxu0 0.0
        %2106 = vmatpush1.msra.mxu0 0.0
        %2107 = vmatprep.subr.mxu0 0.0
        %2108 = vmatpush1.msra.mxu0 0.0
        %2109 = vmatprep.subr.mxu0 0.0
        %2110 = vmatpush1.msra.mxu0 0.0
        %2111 = vmatprep.subr.mxu0 0.0
        %2112 = vmatpush1.msra.mxu0 0.0
        %2113 = vmatprep.subr.mxu0 0.0
        %2114 = vmatpush1.msra.mxu0 0.0
        %2115 = vmatprep.subr.mxu0 0.0
        %2116 = vmatpush1.msra.mxu0 0.0
        %2117 = vmatprep.subr.mxu0 0.0
        %2118 = vmatpush1.msra.mxu0 0.0
        %2119 = vmatprep.subr.mxu0 0.0
        %2120 = vmatpush1.msra.mxu0 0.0
        %2121 = vmatprep.subr.mxu0 0.0
        %2122 = vmatpush1.msra.mxu0 0.0
        %2123 = vmatprep.subr.mxu0 0.0
        %2124 = vmatpush1.msra.mxu0 0.0
        %2125 = vmatprep.subr.mxu0 0.0
        %2126 = vmatpush1.msra.mxu0 0.0
        %2127 = vmatprep.subr.mxu0 0.0
        %2128 = vmatpush1.msra.mxu0 0.0
        %2129 = vmatprep.subr.mxu0 0.0
        %2130 = vmatpush1.msra.mxu0 0.0
        %2131 = vmatprep.subr.mxu0 0.0
        %2132 = vmatpush1.msra.mxu0 0.0
        %2133 = vmatprep.subr.mxu0 0.0
        %2134 = vmatpush1.msra.mxu0 0.0
        %2135 = vmatprep.subr.mxu0 0.0
        %2136 = vmatpush1.msra.mxu0 0.0
        %2137 = vmatprep.mubr.f32.mxu0 0.0
        %2138 = vmatmul.mubr.f32.gmra.mrb[0].mxu0 %v2023
        %v2139 = vpop.f32.mrb[0].mxu0
        %v2140 = vadd.f32 0.0, %v2139
        %v2141 = vpop.f32.mrb[0].mxu0
        %2142 = vmatprep.mubr.f32.mxu0 0.0
        %2143 = vmatmul.mubr.f32.gmra.mrb[0].mxu0 %v2026
        %v2144 = vpop.f32.mrb[0].mxu0
        %v2145 = vadd.f32 0.0, %v2144
        %v2146 = vpop.f32.mrb[0].mxu0
        %2147 = vmatprep.mubr.f32.mxu0 0.0
        %2148 = vmatmul.mubr.f32.gmra.mrb[0].mxu0 %v2029
        %v2149 = vpop.f32.mrb[0].mxu0
        %v2150 = vadd.f32 0.0, %v2149
        %v2151 = vpop.f32.mrb[0].mxu0
        %2152 = vmatprep.mubr.f32.mxu0 0.0
        %2153 = vmatmul.mubr.f32.gmra.mrb[0].mxu0 %v2032
        %v2154 = vpop.f32.mrb[0].mxu0
        %v2155 = vadd.f32 0.0, %v2154
        %v2156 = vpop.f32.mrb[0].mxu0
        %2157 = vmatprep.mubr.f32.mxu0 0.0
        %2158 = vmatmul.mubr.f32.gmra.mrb[0].mxu0 %v2035
        %v2159 = vpop.f32.mrb[0].mxu0
        %v2160 = vadd.f32 0.0, %v2159
        %v2161 = vpop.f32.mrb[0].mxu0
        %2162 = vmatprep.mubr.f32.mxu0 0.0
        %2163 = vmatmul.mubr.f32.gmra.mrb[0].mxu0 %v2038
        %v2164 = vpop.f32.mrb[0].mxu0
        %v2165 = vadd.f32 0.0, %v2164
        %v2166 = vpop.f32.mrb[0].mxu0
        %2167 = vmatprep.mubr.f32.mxu0 0.0
        %2168 = vmatmul.mubr.f32.gmra.mrb[0].mxu0 %v2041
        %v2169 = vpop.f32.mrb[0].mxu0
        %v2170 = vadd.f32 0.0, %v2169
        %v2171 = vpop.f32.mrb[0].mxu0
        %2172 = vmatprep.mubr.f32.mxu0 0.0
        %2173 = vmatmul.mubr.f32.gmra.mrb[0].mxu0 %v2044
        %v2174 = vpop.f32.mrb[0].mxu0
        %v2175 = vadd.f32 0.0, %v2174
        %v2176 = vpop.f32.mrb[0].mxu0
        %2177 = vmatprep.mubr.f32.mxu0 0.0
        %2178 = vmatmul.mubr.f32.gmra.mrb[0].mxu0 %v2047
        %v2179 = vpop.f32.mrb[0].mxu0
        %v2180 = vadd.f32 0.0, %v2179
        %v2181 = vpop.f32.mrb[0].mxu0
        %2182 = vmatprep.mubr.f32.mxu0 0.0
        %2183 = vmatmul.mubr.f32.gmra.mrb[0].mxu0 %v2050
        %v2184 = vpop.f32.mrb[0].mxu0
        %v2185 = vadd.f32 0.0, %v2184
        %v2186 = vpop.f32.mrb[0].mxu0
        %2187 = vmatprep.mubr.f32.mxu0 0.0
        %2188 = vmatmul.mubr.f32.gmra.mrb[0].mxu0 %v2053
        %v2189 = vpop.f32.mrb[0].mxu0
        %v2190 = vadd.f32 0.0, %v2189
        %v2191 = vpop.f32.mrb[0].mxu0
        %2192 = vmatprep.mubr.f32.mxu0 0.0
        %2193 = vmatmul.mubr.f32.gmra.mrb[0].mxu0 %v2056
        %v2194 = vpop.f32.mrb[0].mxu0
        %v2195 = vadd.f32 0.0, %v2194
        %v2196 = vpop.f32.mrb[0].mxu0
        %2197 = vmatprep.mubr.f32.mxu0 0.0
        %2198 = vmatmul.mubr.f32.gmra.mrb[0].mxu0 %v2059
        %v2199 = vpop.f32.mrb[0].mxu0
        %v2200 = vadd.f32 0.0, %v2199
        %v2201 = vpop.f32.mrb[0].mxu0
        %2202 = vmatprep.mubr.f32.mxu0 0.0
        %2203 = vmatmul.mubr.f32.gmra.mrb[0].mxu0 %v2062
        %v2204 = vpop.f32.mrb[0].mxu0
        %v2205 = vadd.f32 0.0, %v2204
        %v2206 = vpop.f32.mrb[0].mxu0
        %2207 = vmatprep.mubr.f32.mxu0 0.0
        %2208 = vmatmul.mubr.f32.gmra.mrb[0].mxu0 %v2065
        %v2209 = vpop.f32.mrb[0].mxu0
        %v2210 = vadd.f32 0.0, %v2209
        %v2211 = vpop.f32.mrb[0].mxu0
        %2212 = vmatprep.mubr.f32.mxu0 0.0
        %2213 = vmatmul.mubr.f32.gmra.mrb[0].mxu0 %v2068
        %v2214 = vpop.f32.mrb[0].mxu0
        %v2215 = vadd.f32 0.0, %v2214
        %v2216 = vpop.f32.mrb[0].mxu0
        %2217 = vdwg.mxu0
        %v2218 = vadd.f32 %v1988, %v2140
        %v2219 = vadd.f32 %v1989, %v2145
        %v2220 = vadd.f32 %v1990, %v2150
        %v2221 = vadd.f32 %v1991, %v2155
        %v2222 = vadd.f32 %v1992, %v2160
        %v2223 = vadd.f32 %v1993, %v2165
        %v2224 = vadd.f32 %v1994, %v2170
        %v2225 = vadd.f32 %v1995, %v2175
        %v2226 = vadd.f32 %v1996, %v2180
        %v2227 = vadd.f32 %v1997, %v2185
        %v2228 = vadd.f32 %v1998, %v2190
        %v2229 = vadd.f32 %v1999, %v2195
        %v2230 = vadd.f32 %v2000, %v2200
        %v2231 = vadd.f32 %v2001, %v2205
        %v2232 = vadd.f32 %v2002, %v2210
        %v2233 = vadd.f32 %v2003, %v2215
        %v2234 = vadd.f32 %v2218, %v204
        %v2235 = vadd.f32 %v2219, %v204
        %v2236 = vadd.f32 %v2220, %v204
        %v2237 = vadd.f32 %v2221, %v204
        %v2238 = vadd.f32 %v2222, %v204
        %v2239 = vadd.f32 %v2223, %v204
        %v2240 = vadd.f32 %v2224, %v204
        %v2241 = vadd.f32 %v2225, %v204
        %v2242 = vadd.f32 %v2226, %v204
        %v2243 = vadd.f32 %v2227, %v204
        %v2244 = vadd.f32 %v2228, %v204
        %v2245 = vadd.f32 %v2229, %v204
        %v2246 = vadd.f32 %v2230, %v204
        %v2247 = vadd.f32 %v2231, %v204
        %v2248 = vadd.f32 %v2232, %v204
        %v2249 = vadd.f32 %v2233, %v204
        %s2250 = scalar_lea.vmem %s173, 384 [#allocation2]
        %2251 = vst.msk [vmem:[%s2250] sm:$0xff] %vm404, %v2234
        %2252 = vst.msk [vmem:[%s2250 + $0x8] sm:$0xff] %vm404, %v2235
        %2253 = vst.msk [vmem:[%s2250 + $0x10] sm:$0xff] %vm404, %v2236
        %2254 = vst.msk [vmem:[%s2250 + $0x18] sm:$0xff] %vm404, %v2237
        %2255 = vst.msk [vmem:[%s2250 + $0x20] sm:$0xff] %vm404, %v2238
        %2256 = vst.msk [vmem:[%s2250 + $0x28] sm:$0xff] %vm404, %v2239
        %2257 = vst.msk [vmem:[%s2250 + $0x30] sm:$0xff] %vm404, %v2240
        %2258 = vst.msk [vmem:[%s2250 + $0x38] sm:$0xff] %vm404, %v2241
        %2259 = vst.msk [vmem:[%s2250 + $0x40] sm:$0xff] %vm404, %v2242
        %2260 = vst.msk [vmem:[%s2250 + $0x48] sm:$0xff] %vm404, %v2243
        %2261 = vst.msk [vmem:[%s2250 + $0x50] sm:$0xff] %vm404, %v2244
        %2262 = vst.msk [vmem:[%s2250 + $0x58] sm:$0xff] %vm404, %v2245
        %2263 = vst.msk [vmem:[%s2250 + $0x60] sm:$0xff] %vm404, %v2246
        %2264 = vst.msk [vmem:[%s2250 + $0x68] sm:$0xff] %vm404, %v2247
        %2265 = vst.msk [vmem:[%s2250 + $0x70] sm:$0xff] %vm404, %v2248
        %2266 = vst.msk [vmem:[%s2250 + $0x78] sm:$0xff] %vm404, %v2249
        %s2267 = sand.u32 %s104, 1
        %s2268 = sand.u32 %s104, 1
        %s2269 = smul.addr %s2268, 512
        %s2270 = scalar_lea.vmem [#allocation2], %s2269
        // Predicated region
        $region33: #{tpu_custom_call.1} parent=31 // pred_check
          %p2271 = pneg %p114
        $region34: #{tpu_custom_call.1} parent=31 // pred_check_branch
          %2273 = sbr.rel (%p2271) target = $region36
        $region35: #{tpu_custom_call.1} parent=31 // pred_region
          %s2274 = smul.addr %s19, 16
          %s2275 = smul.addr %s18, 32
          %s2276 = sadd.s32 %s2274, %s2275
          %s2277 = smul.addr %s2276, 8
          %s2278 = scalar_lea.vmem %s3, %s2277
          // Predicated region
          $region37: #{tpu_custom_call.1} parent=35 // pred_check
            _
          $region38: #{tpu_custom_call.1} parent=35 // pred_check_branch
            %2280 = sbr.rel (0) target = $region40
          $region39: #{tpu_custom_call.1} parent=35 // pred_region
            // Predicated region
            $region41: #{tpu_custom_call.1} parent=39 // pred_check
              _
            $region42: #{tpu_custom_call.1} parent=39 // pred_check_branch
              %2282 = sbr.rel (0) target = $region44
            $region43: #{tpu_custom_call.1} parent=39 // pred_region
              // Predicated region
              $region56: #{tpu_custom_call.1} parent=43 // pred_check
                _
              $region57: #{tpu_custom_call.1} parent=43 // pred_check_branch
                %2423 = sbr.rel (0) target = $region59
              $region58: #{tpu_custom_call.1} parent=43 // pred_region
                loop: start=0, step=1, limit=1
                $region60: #{tpu_custom_call.1} parent=58 // loop_pre_header
                  _
                $region61: #{tpu_custom_call.1} parent=58 // loop_header
                  %s2425 = sphi 0, %s2429
                  %p2426 = scmp.ge.s32.totalorder %s2425, 1
                  %s2430 = sphi %s2270, %s2270
                  %s2431 = sphi %s2278, %s2278
                $region62: #{tpu_custom_call.1} parent=58 // loop_header_branch
                  %2428 = sbr.rel (%p2426) target = $region66
                $region63: #{tpu_custom_call.1} parent=58 // loop_body
                  %v2432 = vld [vmem:[%s2430] sm:$0xff]
                  %2433 = vst [vmem:[%s2431] sm:$0xff] %v2432
                  %v2434 = vld [vmem:[%s2430 + $0x8] sm:$0xff]
                  %2435 = vst [vmem:[%s2431 + $0x8] sm:$0xff] %v2434
                  %v2436 = vld [vmem:[%s2430 + $0x10] sm:$0xff]
                  %2437 = vst [vmem:[%s2431 + $0x10] sm:$0xff] %v2436
                  %v2438 = vld [vmem:[%s2430 + $0x18] sm:$0xff]
                  %2439 = vst [vmem:[%s2431 + $0x18] sm:$0xff] %v2438
                  %v2440 = vld [vmem:[%s2430 + $0x20] sm:$0xff]
                  %2441 = vst [vmem:[%s2431 + $0x20] sm:$0xff] %v2440
                  %v2442 = vld [vmem:[%s2430 + $0x28] sm:$0xff]
                  %2443 = vst [vmem:[%s2431 + $0x28] sm:$0xff] %v2442
                  %v2444 = vld [vmem:[%s2430 + $0x30] sm:$0xff]
                  %2445 = vst [vmem:[%s2431 + $0x30] sm:$0xff] %v2444
                  %v2446 = vld [vmem:[%s2430 + $0x38] sm:$0xff]
                  %2447 = vst [vmem:[%s2431 + $0x38] sm:$0xff] %v2446
                  %v2448 = vld [vmem:[%s2430 + $0x40] sm:$0xff]
                  %2449 = vst [vmem:[%s2431 + $0x40] sm:$0xff] %v2448
                  %v2450 = vld [vmem:[%s2430 + $0x48] sm:$0xff]
                  %2451 = vst [vmem:[%s2431 + $0x48] sm:$0xff] %v2450
                  %v2452 = vld [vmem:[%s2430 + $0x50] sm:$0xff]
                  %2453 = vst [vmem:[%s2431 + $0x50] sm:$0xff] %v2452
                  %v2454 = vld [vmem:[%s2430 + $0x58] sm:$0xff]
                  %2455 = vst [vmem:[%s2431 + $0x58] sm:$0xff] %v2454
                  %v2456 = vld [vmem:[%s2430 + $0x60] sm:$0xff]
                  %2457 = vst [vmem:[%s2431 + $0x60] sm:$0xff] %v2456
                  %v2458 = vld [vmem:[%s2430 + $0x68] sm:$0xff]
                  %2459 = vst [vmem:[%s2431 + $0x68] sm:$0xff] %v2458
                  %v2460 = vld [vmem:[%s2430 + $0x70] sm:$0xff]
                  %2461 = vst [vmem:[%s2431 + $0x70] sm:$0xff] %v2460
                  %v2462 = vld [vmem:[%s2430 + $0x78] sm:$0xff]
                  %2463 = vst [vmem:[%s2431 + $0x78] sm:$0xff] %v2462
                  %v2464 = vld [vmem:[%s2430 + $0x80] sm:$0xff]
                  %2465 = vst [vmem:[%s2431 + $0x200] sm:$0xff] %v2464
                  %v2466 = vld [vmem:[%s2430 + $0x88] sm:$0xff]
                  %2467 = vst [vmem:[%s2431 + $0x208] sm:$0xff] %v2466
                  %v2468 = vld [vmem:[%s2430 + $0x90] sm:$0xff]
                  %2469 = vst [vmem:[%s2431 + $0x210] sm:$0xff] %v2468
                  %v2470 = vld [vmem:[%s2430 + $0x98] sm:$0xff]
                  %2471 = vst [vmem:[%s2431 + $0x218] sm:$0xff] %v2470
                  %v2472 = vld [vmem:[%s2430 + $0xa0] sm:$0xff]
                  %2473 = vst [vmem:[%s2431 + $0x220] sm:$0xff] %v2472
                  %v2474 = vld [vmem:[%s2430 + $0xa8] sm:$0xff]
                  %2475 = vst [vmem:[%s2431 + $0x228] sm:$0xff] %v2474
                  %v2476 = vld [vmem:[%s2430 + $0xb0] sm:$0xff]
                  %2477 = vst [vmem:[%s2431 + $0x230] sm:$0xff] %v2476
                  %v2478 = vld [vmem:[%s2430 + $0xb8] sm:$0xff]
                  %2479 = vst [vmem:[%s2431 + $0x238] sm:$0xff] %v2478
                  %v2480 = vld [vmem:[%s2430 + $0xc0] sm:$0xff]
                  %2481 = vst [vmem:[%s2431 + $0x240] sm:$0xff] %v2480
                  %v2482 = vld [vmem:[%s2430 + $0xc8] sm:$0xff]
                  %2483 = vst [vmem:[%s2431 + $0x248] sm:$0xff] %v2482
                  %v2484 = vld [vmem:[%s2430 + $0xd0] sm:$0xff]
                  %2485 = vst [vmem:[%s2431 + $0x250] sm:$0xff] %v2484
                  %v2486 = vld [vmem:[%s2430 + $0xd8] sm:$0xff]
                  %2487 = vst [vmem:[%s2431 + $0x258] sm:$0xff] %v2486
                  %v2488 = vld [vmem:[%s2430 + $0xe0] sm:$0xff]
                  %2489 = vst [vmem:[%s2431 + $0x260] sm:$0xff] %v2488
                  %v2490 = vld [vmem:[%s2430 + $0xe8] sm:$0xff]
                  %2491 = vst [vmem:[%s2431 + $0x268] sm:$0xff] %v2490
                  %v2492 = vld [vmem:[%s2430 + $0xf0] sm:$0xff]
                  %2493 = vst [vmem:[%s2431 + $0x270] sm:$0xff] %v2492
                  %v2494 = vld [vmem:[%s2430 + $0xf8] sm:$0xff]
                  %2495 = vst [vmem:[%s2431 + $0x278] sm:$0xff] %v2494
                  %v2496 = vld [vmem:[%s2430 + $0x100] sm:$0xff]
                  %2497 = vst [vmem:[%s2431 + $0x400] sm:$0xff] %v2496
                  %v2498 = vld [vmem:[%s2430 + $0x108] sm:$0xff]
                  %2499 = vst [vmem:[%s2431 + $0x408] sm:$0xff] %v2498
                  %v2500 = vld [vmem:[%s2430 + $0x110] sm:$0xff]
                  %2501 = vst [vmem:[%s2431 + $0x410] sm:$0xff] %v2500
                  %v2502 = vld [vmem:[%s2430 + $0x118] sm:$0xff]
                  %2503 = vst [vmem:[%s2431 + $0x418] sm:$0xff] %v2502
                  %v2504 = vld [vmem:[%s2430 + $0x120] sm:$0xff]
                  %2505 = vst [vmem:[%s2431 + $0x420] sm:$0xff] %v2504
                  %v2506 = vld [vmem:[%s2430 + $0x128] sm:$0xff]
                  %2507 = vst [vmem:[%s2431 + $0x428] sm:$0xff] %v2506
                  %v2508 = vld [vmem:[%s2430 + $0x130] sm:$0xff]
                  %2509 = vst [vmem:[%s2431 + $0x430] sm:$0xff] %v2508
                  %v2510 = vld [vmem:[%s2430 + $0x138] sm:$0xff]
                  %2511 = vst [vmem:[%s2431 + $0x438] sm:$0xff] %v2510
                  %v2512 = vld [vmem:[%s2430 + $0x140] sm:$0xff]
                  %2513 = vst [vmem:[%s2431 + $0x440] sm:$0xff] %v2512
                  %v2514 = vld [vmem:[%s2430 + $0x148] sm:$0xff]
                  %2515 = vst [vmem:[%s2431 + $0x448] sm:$0xff] %v2514
                  %v2516 = vld [vmem:[%s2430 + $0x150] sm:$0xff]
                  %2517 = vst [vmem:[%s2431 + $0x450] sm:$0xff] %v2516
                  %v2518 = vld [vmem:[%s2430 + $0x158] sm:$0xff]
                  %2519 = vst [vmem:[%s2431 + $0x458] sm:$0xff] %v2518
                  %v2520 = vld [vmem:[%s2430 + $0x160] sm:$0xff]
                  %2521 = vst [vmem:[%s2431 + $0x460] sm:$0xff] %v2520
                  %v2522 = vld [vmem:[%s2430 + $0x168] sm:$0xff]
                  %2523 = vst [vmem:[%s2431 + $0x468] sm:$0xff] %v2522
                  %v2524 = vld [vmem:[%s2430 + $0x170] sm:$0xff]
                  %2525 = vst [vmem:[%s2431 + $0x470] sm:$0xff] %v2524
                  %v2526 = vld [vmem:[%s2430 + $0x178] sm:$0xff]
                  %2527 = vst [vmem:[%s2431 + $0x478] sm:$0xff] %v2526
                  %v2528 = vld [vmem:[%s2430 + $0x180] sm:$0xff]
                  %2529 = vst [vmem:[%s2431 + $0x600] sm:$0xff] %v2528
                  %v2530 = vld [vmem:[%s2430 + $0x188] sm:$0xff]
                  %2531 = vst [vmem:[%s2431 + $0x608] sm:$0xff] %v2530
                  %v2532 = vld [vmem:[%s2430 + $0x190] sm:$0xff]
                  %2533 = vst [vmem:[%s2431 + $0x610] sm:$0xff] %v2532
                  %v2534 = vld [vmem:[%s2430 + $0x198] sm:$0xff]
                  %2535 = vst [vmem:[%s2431 + $0x618] sm:$0xff] %v2534
                  %v2536 = vld [vmem:[%s2430 + $0x1a0] sm:$0xff]
                  %2537 = vst [vmem:[%s2431 + $0x620] sm:$0xff] %v2536
                  %v2538 = vld [vmem:[%s2430 + $0x1a8] sm:$0xff]
                  %2539 = vst [vmem:[%s2431 + $0x628] sm:$0xff] %v2538
                  %v2540 = vld [vmem:[%s2430 + $0x1b0] sm:$0xff]
                  %2541 = vst [vmem:[%s2431 + $0x630] sm:$0xff] %v2540
                  %v2542 = vld [vmem:[%s2430 + $0x1b8] sm:$0xff]
                  %2543 = vst [vmem:[%s2431 + $0x638] sm:$0xff] %v2542
                  %v2544 = vld [vmem:[%s2430 + $0x1c0] sm:$0xff]
                  %2545 = vst [vmem:[%s2431 + $0x640] sm:$0xff] %v2544
                  %v2546 = vld [vmem:[%s2430 + $0x1c8] sm:$0xff]
                  %2547 = vst [vmem:[%s2431 + $0x648] sm:$0xff] %v2546
                  %v2548 = vld [vmem:[%s2430 + $0x1d0] sm:$0xff]
                  %2549 = vst [vmem:[%s2431 + $0x650] sm:$0xff] %v2548
                  %v2550 = vld [vmem:[%s2430 + $0x1d8] sm:$0xff]
                  %2551 = vst [vmem:[%s2431 + $0x658] sm:$0xff] %v2550
                  %v2552 = vld [vmem:[%s2430 + $0x1e0] sm:$0xff]
                  %2553 = vst [vmem:[%s2431 + $0x660] sm:$0xff] %v2552
                  %v2554 = vld [vmem:[%s2430 + $0x1e8] sm:$0xff]
                  %2555 = vst [vmem:[%s2431 + $0x668] sm:$0xff] %v2554
                  %v2556 = vld [vmem:[%s2430 + $0x1f0] sm:$0xff]
                  %2557 = vst [vmem:[%s2431 + $0x670] sm:$0xff] %v2556
                  %v2558 = vld [vmem:[%s2430 + $0x1f8] sm:$0xff]
                  %2559 = vst [vmem:[%s2431 + $0x678] sm:$0xff] %v2558
                $region64: #{tpu_custom_call.1} parent=58 // loop_footer
                  %s2429 = sadd.s32 1, %s2425
                $region65: #{tpu_custom_call.1} parent=58 // loop_footer_branch
                  %2424 = sbr.rel target = $region61
                $region66: #{tpu_custom_call.1} parent=58 // loop_exit
                  _
              $region59: #{tpu_custom_call.1} parent=43 // pred_fallthru
                _
              // Predicated region
              $region67: #{tpu_custom_call.1} parent=43 // pred_check
                _
              $region68: #{tpu_custom_call.1} parent=43 // pred_check_branch
                %2561 = sbr.rel target = $region70
              $region69: #{tpu_custom_call.1} parent=43 // pred_region
                _
              $region70: #{tpu_custom_call.1} parent=43 // pred_fallthru
                _
            $region44: #{tpu_custom_call.1} parent=39 // pred_fallthru
              _
            // Predicated region
            $region45: #{tpu_custom_call.1} parent=39 // pred_check
              _
            $region46: #{tpu_custom_call.1} parent=39 // pred_check_branch
              %2284 = sbr.rel target = $region48
            $region47: #{tpu_custom_call.1} parent=39 // pred_region
              loop: start=0, step=1, limit=1
              $region49: #{tpu_custom_call.1} parent=47 // loop_pre_header
                _
              $region50: #{tpu_custom_call.1} parent=47 // loop_header
                %s2287 = sphi 0, %s2291
                %p2288 = scmp.ge.s32.totalorder %s2287, 1
                %s2292 = sphi %s2270, %s2270
                %s2293 = sphi %s2278, %s2278
              $region51: #{tpu_custom_call.1} parent=47 // loop_header_branch
                %2290 = sbr.rel (%p2288) target = $region55
              $region52: #{tpu_custom_call.1} parent=47 // loop_body
                %v2294 = vld [vmem:[%s2292] sm:$0xff]
                %2295 = vst [vmem:[%s2293] sm:$0xff] %v2294
                %v2296 = vld [vmem:[%s2292 + $0x8] sm:$0xff]
                %2297 = vst [vmem:[%s2293 + $0x8] sm:$0xff] %v2296
                %v2298 = vld [vmem:[%s2292 + $0x10] sm:$0xff]
                %2299 = vst [vmem:[%s2293 + $0x10] sm:$0xff] %v2298
                %v2300 = vld [vmem:[%s2292 + $0x18] sm:$0xff]
                %2301 = vst [vmem:[%s2293 + $0x18] sm:$0xff] %v2300
                %v2302 = vld [vmem:[%s2292 + $0x20] sm:$0xff]
                %2303 = vst [vmem:[%s2293 + $0x20] sm:$0xff] %v2302
                %v2304 = vld [vmem:[%s2292 + $0x28] sm:$0xff]
                %2305 = vst [vmem:[%s2293 + $0x28] sm:$0xff] %v2304
                %v2306 = vld [vmem:[%s2292 + $0x30] sm:$0xff]
                %2307 = vst [vmem:[%s2293 + $0x30] sm:$0xff] %v2306
                %v2308 = vld [vmem:[%s2292 + $0x38] sm:$0xff]
                %2309 = vst [vmem:[%s2293 + $0x38] sm:$0xff] %v2308
                %v2310 = vld [vmem:[%s2292 + $0x40] sm:$0xff]
                %2311 = vst [vmem:[%s2293 + $0x40] sm:$0xff] %v2310
                %v2312 = vld [vmem:[%s2292 + $0x48] sm:$0xff]
                %2313 = vst [vmem:[%s2293 + $0x48] sm:$0xff] %v2312
                %v2314 = vld [vmem:[%s2292 + $0x50] sm:$0xff]
                %2315 = vst [vmem:[%s2293 + $0x50] sm:$0xff] %v2314
                %v2316 = vld [vmem:[%s2292 + $0x58] sm:$0xff]
                %2317 = vst [vmem:[%s2293 + $0x58] sm:$0xff] %v2316
                %v2318 = vld [vmem:[%s2292 + $0x60] sm:$0xff]
                %2319 = vst [vmem:[%s2293 + $0x60] sm:$0xff] %v2318
                %v2320 = vld [vmem:[%s2292 + $0x68] sm:$0xff]
                %2321 = vst [vmem:[%s2293 + $0x68] sm:$0xff] %v2320
                %v2322 = vld [vmem:[%s2292 + $0x70] sm:$0xff]
                %2323 = vst [vmem:[%s2293 + $0x70] sm:$0xff] %v2322
                %v2324 = vld [vmem:[%s2292 + $0x78] sm:$0xff]
                %2325 = vst [vmem:[%s2293 + $0x78] sm:$0xff] %v2324
                %v2326 = vld [vmem:[%s2292 + $0x80] sm:$0xff]
                %2327 = vst [vmem:[%s2293 + $0x200] sm:$0xff] %v2326
                %v2328 = vld [vmem:[%s2292 + $0x88] sm:$0xff]
                %2329 = vst [vmem:[%s2293 + $0x208] sm:$0xff] %v2328
                %v2330 = vld [vmem:[%s2292 + $0x90] sm:$0xff]
                %2331 = vst [vmem:[%s2293 + $0x210] sm:$0xff] %v2330
                %v2332 = vld [vmem:[%s2292 + $0x98] sm:$0xff]
                %2333 = vst [vmem:[%s2293 + $0x218] sm:$0xff] %v2332
                %v2334 = vld [vmem:[%s2292 + $0xa0] sm:$0xff]
                %2335 = vst [vmem:[%s2293 + $0x220] sm:$0xff] %v2334
                %v2336 = vld [vmem:[%s2292 + $0xa8] sm:$0xff]
                %2337 = vst [vmem:[%s2293 + $0x228] sm:$0xff] %v2336
                %v2338 = vld [vmem:[%s2292 + $0xb0] sm:$0xff]
                %2339 = vst [vmem:[%s2293 + $0x230] sm:$0xff] %v2338
                %v2340 = vld [vmem:[%s2292 + $0xb8] sm:$0xff]
                %2341 = vst [vmem:[%s2293 + $0x238] sm:$0xff] %v2340
                %v2342 = vld [vmem:[%s2292 + $0xc0] sm:$0xff]
                %2343 = vst [vmem:[%s2293 + $0x240] sm:$0xff] %v2342
                %v2344 = vld [vmem:[%s2292 + $0xc8] sm:$0xff]
                %2345 = vst [vmem:[%s2293 + $0x248] sm:$0xff] %v2344
                %v2346 = vld [vmem:[%s2292 + $0xd0] sm:$0xff]
                %2347 = vst [vmem:[%s2293 + $0x250] sm:$0xff] %v2346
                %v2348 = vld [vmem:[%s2292 + $0xd8] sm:$0xff]
                %2349 = vst [vmem:[%s2293 + $0x258] sm:$0xff] %v2348
                %v2350 = vld [vmem:[%s2292 + $0xe0] sm:$0xff]
                %2351 = vst [vmem:[%s2293 + $0x260] sm:$0xff] %v2350
                %v2352 = vld [vmem:[%s2292 + $0xe8] sm:$0xff]
                %2353 = vst [vmem:[%s2293 + $0x268] sm:$0xff] %v2352
                %v2354 = vld [vmem:[%s2292 + $0xf0] sm:$0xff]
                %2355 = vst [vmem:[%s2293 + $0x270] sm:$0xff] %v2354
                %v2356 = vld [vmem:[%s2292 + $0xf8] sm:$0xff]
                %2357 = vst [vmem:[%s2293 + $0x278] sm:$0xff] %v2356
                %v2358 = vld [vmem:[%s2292 + $0x100] sm:$0xff]
                %2359 = vst [vmem:[%s2293 + $0x400] sm:$0xff] %v2358
                %v2360 = vld [vmem:[%s2292 + $0x108] sm:$0xff]
                %2361 = vst [vmem:[%s2293 + $0x408] sm:$0xff] %v2360
                %v2362 = vld [vmem:[%s2292 + $0x110] sm:$0xff]
                %2363 = vst [vmem:[%s2293 + $0x410] sm:$0xff] %v2362
                %v2364 = vld [vmem:[%s2292 + $0x118] sm:$0xff]
                %2365 = vst [vmem:[%s2293 + $0x418] sm:$0xff] %v2364
                %v2366 = vld [vmem:[%s2292 + $0x120] sm:$0xff]
                %2367 = vst [vmem:[%s2293 + $0x420] sm:$0xff] %v2366
                %v2368 = vld [vmem:[%s2292 + $0x128] sm:$0xff]
                %2369 = vst [vmem:[%s2293 + $0x428] sm:$0xff] %v2368
                %v2370 = vld [vmem:[%s2292 + $0x130] sm:$0xff]
                %2371 = vst [vmem:[%s2293 + $0x430] sm:$0xff] %v2370
                %v2372 = vld [vmem:[%s2292 + $0x138] sm:$0xff]
                %2373 = vst [vmem:[%s2293 + $0x438] sm:$0xff] %v2372
                %v2374 = vld [vmem:[%s2292 + $0x140] sm:$0xff]
                %2375 = vst [vmem:[%s2293 + $0x440] sm:$0xff] %v2374
                %v2376 = vld [vmem:[%s2292 + $0x148] sm:$0xff]
                %2377 = vst [vmem:[%s2293 + $0x448] sm:$0xff] %v2376
                %v2378 = vld [vmem:[%s2292 + $0x150] sm:$0xff]
                %2379 = vst [vmem:[%s2293 + $0x450] sm:$0xff] %v2378
                %v2380 = vld [vmem:[%s2292 + $0x158] sm:$0xff]
                %2381 = vst [vmem:[%s2293 + $0x458] sm:$0xff] %v2380
                %v2382 = vld [vmem:[%s2292 + $0x160] sm:$0xff]
                %2383 = vst [vmem:[%s2293 + $0x460] sm:$0xff] %v2382
                %v2384 = vld [vmem:[%s2292 + $0x168] sm:$0xff]
                %2385 = vst [vmem:[%s2293 + $0x468] sm:$0xff] %v2384
                %v2386 = vld [vmem:[%s2292 + $0x170] sm:$0xff]
                %2387 = vst [vmem:[%s2293 + $0x470] sm:$0xff] %v2386
                %v2388 = vld [vmem:[%s2292 + $0x178] sm:$0xff]
                %2389 = vst [vmem:[%s2293 + $0x478] sm:$0xff] %v2388
                %v2390 = vld [vmem:[%s2292 + $0x180] sm:$0xff]
                %2391 = vst [vmem:[%s2293 + $0x600] sm:$0xff] %v2390
                %v2392 = vld [vmem:[%s2292 + $0x188] sm:$0xff]
                %2393 = vst [vmem:[%s2293 + $0x608] sm:$0xff] %v2392
                %v2394 = vld [vmem:[%s2292 + $0x190] sm:$0xff]
                %2395 = vst [vmem:[%s2293 + $0x610] sm:$0xff] %v2394
                %v2396 = vld [vmem:[%s2292 + $0x198] sm:$0xff]
                %2397 = vst [vmem:[%s2293 + $0x618] sm:$0xff] %v2396
                %v2398 = vld [vmem:[%s2292 + $0x1a0] sm:$0xff]
                %2399 = vst [vmem:[%s2293 + $0x620] sm:$0xff] %v2398
                %v2400 = vld [vmem:[%s2292 + $0x1a8] sm:$0xff]
                %2401 = vst [vmem:[%s2293 + $0x628] sm:$0xff] %v2400
                %v2402 = vld [vmem:[%s2292 + $0x1b0] sm:$0xff]
                %2403 = vst [vmem:[%s2293 + $0x630] sm:$0xff] %v2402
                %v2404 = vld [vmem:[%s2292 + $0x1b8] sm:$0xff]
                %2405 = vst [vmem:[%s2293 + $0x638] sm:$0xff] %v2404
                %v2406 = vld [vmem:[%s2292 + $0x1c0] sm:$0xff]
                %2407 = vst [vmem:[%s2293 + $0x640] sm:$0xff] %v2406
                %v2408 = vld [vmem:[%s2292 + $0x1c8] sm:$0xff]
                %2409 = vst [vmem:[%s2293 + $0x648] sm:$0xff] %v2408
                %v2410 = vld [vmem:[%s2292 + $0x1d0] sm:$0xff]
                %2411 = vst [vmem:[%s2293 + $0x650] sm:$0xff] %v2410
                %v2412 = vld [vmem:[%s2292 + $0x1d8] sm:$0xff]
                %2413 = vst [vmem:[%s2293 + $0x658] sm:$0xff] %v2412
                %v2414 = vld [vmem:[%s2292 + $0x1e0] sm:$0xff]
                %2415 = vst [vmem:[%s2293 + $0x660] sm:$0xff] %v2414
                %v2416 = vld [vmem:[%s2292 + $0x1e8] sm:$0xff]
                %2417 = vst [vmem:[%s2293 + $0x668] sm:$0xff] %v2416
                %v2418 = vld [vmem:[%s2292 + $0x1f0] sm:$0xff]
                %2419 = vst [vmem:[%s2293 + $0x670] sm:$0xff] %v2418
                %v2420 = vld [vmem:[%s2292 + $0x1f8] sm:$0xff]
                %2421 = vst [vmem:[%s2293 + $0x678] sm:$0xff] %v2420
              $region53: #{tpu_custom_call.1} parent=47 // loop_footer
                %s2291 = sadd.s32 1, %s2287
              $region54: #{tpu_custom_call.1} parent=47 // loop_footer_branch
                %2286 = sbr.rel target = $region50
              $region55: #{tpu_custom_call.1} parent=47 // loop_exit
                _
            $region48: #{tpu_custom_call.1} parent=39 // pred_fallthru
              _
          $region40: #{tpu_custom_call.1} parent=35 // pred_fallthru
            _
          %2562 = vnop
        $region36: #{tpu_custom_call.1} parent=31 // pred_fallthru
          _
      $region32: #{tpu_custom_call.1} parent=5 // pred_fallthru
        _
      %p2563 = scmp.le.s32.totalorder 2, %s9
      // Predicated region
      $region71: #{tpu_custom_call.1} parent=5 // pred_check
        %p2564 = pneg %p2563
      $region72: #{tpu_custom_call.1} parent=5 // pred_check_branch
        %2566 = sbr.rel (%p2564) target = $region74
      $region73: #{tpu_custom_call.1} parent=5 // pred_region
        %s2567 = ssub.s32 %s9, 2
        // Predicated region
        $region75: #{tpu_custom_call.1} parent=73 // pred_check
          %p2568 = pneg %p120
        $region76: #{tpu_custom_call.1} parent=73 // pred_check_branch
          %2570 = sbr.rel (%p2568) target = $region78
        $region77: #{tpu_custom_call.1} parent=73 // pred_region
          %s2571 = sand.u32 %s105, 1
          %s2572 = sand.u32 %s105, 1
          %s2573 = smul.addr %s2572, 512
          %s2574 = scalar_lea.vmem [#allocation2], %s2573
        $region78: #{tpu_custom_call.1} parent=73 // pred_fallthru
          _
      $region74: #{tpu_custom_call.1} parent=5 // pred_fallthru
        _
    $region6: #{tpu_custom_call.1} parent=1 // loop_footer
      %s13 = sadd.s32 1, %s9
    $region7: #{tpu_custom_call.1} parent=1 // loop_footer_branch
      %8 = sbr.rel target = $region3
    $region8: #{tpu_custom_call.1} parent=1 // loop_exit
      _

</llo_original>
